<compile_context>
chip_gen: v5e
topology: v5e:2x2
jax: 0.10.0
libtpu: 0.0.40
codegen_flags: <defaults>
</compile_context>

<pallas_src>
import jax
import jax.numpy as jnp
from jax import lax
from jax.experimental import pallas as pl
from jax.experimental.pallas import tpu as pltpu

# loss weights from YOLACTLoss.__init__
W_CLS, W_BOX, W_MASK, W_PROTO, W_SEM = 1.0, 1.5, 6.125, 1.0, 1.0
FOCAL_ALPHA, FOCAL_GAMMA = 0.25, 2.0
EPS = 1e-6
DICE_SMOOTH = 1e-6


def _sum_all(x):
    """(R, C) -> (1, 1) via lane reduce then sublane reduce."""
    return jnp.sum(jnp.sum(x, axis=1, keepdims=True), axis=0, keepdims=True)


def _make_kernel(hw_total):
    inv_hw = 1.0 / float(hw_total)

    def kernel(cls_ref, box_ref, coefT_ref, lab_ref, posc_ref, tbox_ref,
               proto_ref, mask_ref, out_ref,
               g_acc, psum_acc, msum_acc, bce_acc):
        f32 = jnp.float32
        hw_i = pl.program_id(1)
        n_hw = pl.num_programs(1)

        # ---- init per-batch accumulators at the first HW tile ----
        @pl.when(hw_i == 0)
        def _init():
            g_acc[...] = jnp.zeros_like(g_acc)
            psum_acc[...] = jnp.zeros_like(psum_acc)
            msum_acc[...] = jnp.zeros_like(msum_acc)
            bce_acc[...] = jnp.zeros_like(bce_acc)

        # ---- streaming work over the current HW tile (f32 from HBM) ----
        proto_f = proto_ref[0]            # (P, HWt) f32
        mask_f = mask_ref[0]              # (M, HWt) f32

        # Dice gram matrix G[p, i] = sum_hw proto[p,hw] * masks[i,hw]:
        # the (N, HW) coef@proto product is never materialized; HW streams
        # through the MXU and only the tiny (P, M) output is accumulated.
        # TODO(synk): check the NT-contraction lowering for a per-slab vxpose
        # of the stationary operand; if present, feed proto as (HW, P).
        g_acc[...] += lax.dot_general(
            proto_f, mask_f,
            dimension_numbers=(((1,), (1,)), ((), ())),
            preferred_element_type=jnp.float32)

        # Per-row HW sums (kept on VPU/XLU; kernel is HBM-bound, VALU has slack).
        psum_acc[...] += jnp.sum(proto_f, axis=1, keepdims=True)   # (P, 1)
        msum_acc[...] += jnp.sum(mask_f, axis=1, keepdims=True)    # (M, 1)

        # Proto BCE-with-logits partial sums; the -x*y term is dropped here and
        # recovered exactly at finalize from trace(G).
        x = proto_f
        bce_acc[...] += jnp.sum(
            jnp.maximum(x, 0.0) + jnp.log(1.0 + jnp.exp(-jnp.abs(x))),
            axis=1, keepdims=True)                                  # (P, 1)

        # ---- finalize once per batch element, at the last HW tile ----
        @pl.when(hw_i == n_hw - 1)
        def _finalize():
            pred_cls = cls_ref[0]     # (N, C) f32
            pred_box = box_ref[0]     # (N, 4) f32
            coef_t = coefT_ref[0]     # (P, N) f32  (pred_masks[b] transposed)
            lab_row = lab_ref[0]      # (1, M) int32
            pos_col = posc_ref[0]     # (M, 1) f32
            tgt_box = tbox_ref[0]     # (M, 4) f32

            lab_row_f = lab_row.astype(f32)
            pos_row = (lab_row > 0).astype(f32)                    # (1, M)
            num_pos = jnp.sum(pos_col, axis=0, keepdims=True)      # (1, 1)
            gate = num_pos > 0.0                                   # torch: if num_pos > 0

            # -- 1) Focal loss (instance mode: sigmoid, labels broadcast over rows)
            p = jax.nn.sigmoid(pred_cls)
            tp = jnp.clip(p, EPS, 1.0 - EPS)
            is_one = (lab_row_f == 1.0)
            pt = jnp.where(is_one, tp, 1.0 - tp)
            one_m = 1.0 - pt
            focal_w = one_m * one_m if FOCAL_GAMMA == 2.0 else one_m ** FOCAL_GAMMA
            alpha_w = jnp.where(is_one, FOCAL_ALPHA, 1.0 - FOCAL_ALPHA)
            l_cls = _sum_all(focal_w * alpha_w * (-jnp.log(pt))) * (
                1.0 / float(pred_cls.shape[0] * pred_cls.shape[1]))

            # -- 2) Smooth L1 box loss over positive rows (mean, exact divide)
            d = pred_box - tgt_box
            ad = jnp.abs(d)
            sl1 = jnp.where(ad < 1.0, 0.5 * d * d, ad - 0.5)
            l_box = _sum_all(sl1 * pos_col) / (4.0 * jnp.maximum(num_pos, 1.0))

            # -- 3) Dice mask loss from the small accumulators
            coef_pos_t = coef_t * pos_row                           # (P, N)
            inter = _sum_all(coef_pos_t * g_acc[...])
            c_col = jnp.sum(coef_pos_t, axis=1, keepdims=True)      # (P, 1)
            s_pred = _sum_all(psum_acc[...] * c_col)
            s_tgt = _sum_all(msum_acc[...] * pos_col)
            dice = (2.0 * inter + DICE_SMOOTH) / (s_pred + s_tgt + DICE_SMOOTH)
            l_mask = 1.0 - dice

            # -- 4) Proto BCE mean; add the -x*y term back via trace(G)
            pp, mm = g_acc.shape
            ri = lax.broadcasted_iota(jnp.int32, (pp, mm), 0)
            ci = lax.broadcasted_iota(jnp.int32, (pp, mm), 1)
            xy_sum = _sum_all(jnp.where(ri == ci, g_acc[...], 0.0))
            l_proto = (jnp.sum(bce_acc[...], axis=0, keepdims=True) - xy_sum) * (
                inv_hw / float(pp))

            # -- 5) Semantic loss: cross_entropy(pred_cls.T, labels, ignore=255)
            lmax = jnp.max(pred_cls, axis=0, keepdims=True)
            z = pred_cls - lmax
            logp = z - jnp.log(jnp.sum(jnp.exp(z), axis=0, keepdims=True))  # (N, C)
            nn_, cc_ = pred_cls.shape
            row_ids = lax.broadcasted_iota(jnp.int32, (nn_, cc_), 0)
            one_hot = (row_ids == lab_row).astype(f32)                      # (N, C)
            nll = -jnp.sum(one_hot * logp, axis=0, keepdims=True)           # (1, C)
            valid = (lab_row != 255).astype(f32)                            # (1, C)
            valid_cnt = jnp.sum(valid, axis=1, keepdims=True)
            l_sem = jnp.sum(nll * valid, axis=1, keepdims=True) / jnp.maximum(
                valid_cnt, 1.0)

            # -- apply weights and the per-batch num_pos > 0 gate
            zero = jnp.zeros_like(num_pos)
            l_cls = jnp.where(gate, l_cls * W_CLS, zero)
            l_box = jnp.where(gate, l_box * W_BOX, zero)
            l_mask = jnp.where(gate, l_mask * W_MASK, zero)
            l_proto = jnp.where(gate, l_proto * W_PROTO, zero)
            l_sem = jnp.where(gate, l_sem * W_SEM, zero)

            # pack into a lane-dense (8,128) tile: row i holds loss component i
            rows = lax.broadcasted_iota(jnp.int32, (8, 128), 0)
            tile = (jnp.where(rows == 0, l_cls, 0.0)
                    + jnp.where(rows == 1, l_box, 0.0)
                    + jnp.where(rows == 2, l_mask, 0.0)
                    + jnp.where(rows == 3, l_proto, 0.0)
                    + jnp.where(rows == 4, l_sem, 0.0))
            out_ref[...] = tile[None].astype(out_ref.dtype)

    return kernel


def _vmem_capacity_bytes():
    try:
        cap = getattr(pltpu.get_tpu_info(), "vmem_capacity_bytes", None)
        cap = int(cap) if cap else 0
    except Exception:
        cap = 0
    if cap <= 0:
        cap = 64 * 1024 * 1024          # conservative fallback (v7x floor)
    return cap


def _default_hw_tile_cap(p_rows, m_rows):
    """Generation-aware cap on the streamed HW tile width.

    Sized so 2 streams x 2 pipeline buffers x rows x tile x 4B fits in half the
    physical VMEM (v5e/v6e 128 MiB, v7x 64 MiB), clamped to [128, 64K] lanes.
    """
    stream_budget = _vmem_capacity_bytes() // 2
    per_col_bytes = (p_rows + m_rows) * 4 * 2
    cap = stream_budget // max(per_col_bytes, 1)
    cap = max(128, min(cap, 64 * 1024))
    return (cap // 128) * 128


def _pick_hw_tile(hw, max_tile):
    """Largest multiple-of-128 divisor of hw that is <= max_tile (else full hw).

    The tile always divides HW exactly, so no zero-padded pixels are streamed
    (they would otherwise bias the proto BCE accumulator by log(2) each).
    """
    if hw <= max_tile:
        return hw
    t = (max_tile // 128) * 128
    while t >= 128:
        if hw % t == 0:
            return t
        t -= 128
    return hw


def yolact_loss_pallas(pred_cls, pred_boxes, pred_masks, proto, labels, boxes,
                       masks, *, max_hw_tile=None):
    B, N, C = pred_cls.shape
    P = pred_masks.shape[-1]
    H, W = proto.shape[2], proto.shape[3]
    HW = H * W
    M = labels.shape[-1]

    # The reference PyTorch code itself only runs when these coincide (its
    # broadcasting / boolean-indexing / BCE shapes require it).  Fail loudly
    # instead of silently producing wrong numbers.
    if not (N == M == C == P):
        raise ValueError(
            f"YOLACTLoss requires N == M == num_classes == num_protos; got "
            f"N={N}, M={M}, num_classes={C}, num_protos={P}")
    if masks.shape[-2:] != (H, W) or masks.shape[-3] != M:
        raise ValueError("target masks must be (B, M, H, W) matching proto_out")

    if max_hw_tile is None:
        max_hw_tile = _default_hw_tile_cap(P, M)
    hw_tile = _pick_hw_tile(HW, max_hw_tile)
    n_hw = HW // hw_tile

    f32 = jnp.float32
    # HW-sized tensors are streamed as f32 straight from HBM (no standalone
    # bf16 pre-cast pass); all reductions/accumulators are f32.
    proto_flat = proto.reshape(B, P, HW).astype(f32)
    masks_flat = masks.reshape(B, M, HW).astype(f32)
    coef_t = jnp.swapaxes(pred_masks.astype(f32), 1, 2)      # (B, P, N), tiny
    lab_row = labels.reshape(B, 1, M).astype(jnp.int32)
    pos_col = (labels > 0).astype(f32).reshape(B, M, 1)

    stream_bytes = (P + M) * hw_tile * 4 * 2                 # double-buffered streams
    vmem_limit = min(int(_vmem_capacity_bytes() * 0.9),
                     max(32 * 1024 * 1024, stream_bytes + 16 * 1024 * 1024))

    cost = pl.CostEstimate(
        flops=int(2 * B * M * P * HW + 10 * B * (P + M) * HW),
        transcendentals=int(2 * B * P * HW),
        bytes_accessed=int(4 * B * (P + M) * HW
                           + 4 * B * (N * C + 4 * N + P * N + 4 * M + 2 * M)),
    )

    kernel = _make_kernel(HW)

    out = pl.pallas_call(
        kernel,
        out_shape=jax.ShapeDtypeStruct((B, 8, 128), jnp.float32),
        grid_spec=pltpu.PrefetchScalarGridSpec(
            num_scalar_prefetch=0,
            grid=(B, n_hw),
            in_specs=[
                # per-batch small tensors: block index constant across the HW
                # axis -> resident in VMEM, no re-DMA between hw steps.
                pl.BlockSpec((1, N, C), lambda b, h: (b, 0, 0)),
                pl.BlockSpec((1, N, 4), lambda b, h: (b, 0, 0)),
                pl.BlockSpec((1, P, N), lambda b, h: (b, 0, 0)),
                pl.BlockSpec((1, 1, M), lambda b, h: (b, 0, 0)),
                pl.BlockSpec((1, M, 1), lambda b, h: (b, 0, 0)),
                pl.BlockSpec((1, M, 4), lambda b, h: (b, 0, 0)),
                # HW-streamed tensors (f32)
                pl.BlockSpec((1, P, hw_tile), lambda b, h: (b, 0, h)),
                pl.BlockSpec((1, M, hw_tile), lambda b, h: (b, 0, h)),
            ],
            out_specs=pl.BlockSpec((1, 8, 128), lambda b, h: (b, 0, 0)),
            scratch_shapes=[
                pltpu.VMEM((P, M), jnp.float32),   # G = proto @ masks^T accumulator
                pltpu.VMEM((P, 1), jnp.float32),   # proto row sums over HW
                pltpu.VMEM((M, 1), jnp.float32),   # mask row sums over HW
                pltpu.VMEM((P, 1), jnp.float32),   # proto-BCE per-row partial sums
            ],
        ),
        compiler_params=pltpu.CompilerParams(
            dimension_semantics=("parallel", "arbitrary"),
            vmem_limit_bytes=int(vmem_limit)),
        cost_estimate=cost,
    )(pred_cls.astype(f32), pred_boxes.astype(f32), coef_t, lab_row, pos_col,
      boxes.astype(f32), proto_flat, masks_flat)

    per_batch = out[:, :5, 0]                 # (B, 5) weighted per-batch losses
    comp = jnp.sum(per_batch, axis=0) / B
    losses = {
        'loss_cls': comp[0],
        'loss_box': comp[1],
        'loss_mask': comp[2],
        'loss_proto': comp[3],
        'loss_semantic': comp[4],
    }
    losses['loss'] = jnp.sum(comp)
    return losses


# ---------------------------------------------------------------------------
# Pure-JAX f32 mirror of the PyTorch forward (verification only)
# ---------------------------------------------------------------------------
def yolact_loss_ref(pred_cls, pred_boxes, pred_masks, proto, labels, boxes,
                    masks):
    B, N, C = pred_cls.shape
    P = pred_masks.shape[-1]
    HW = proto.shape[2] * proto.shape[3]
    names = ['loss_cls', 'loss_box', 'loss_mask', 'loss_proto', 'loss_semantic']
    acc = {k: jnp.float32(0.0) for k in names}
    for b in range(B):
        lab = labels[b]
        pos = lab > 0
        num_pos = jnp.sum(pos.astype(jnp.float32))
        gate = num_pos > 0
        posf = pos[:, None].astype(jnp.float32)
        # focal (instance mode)
        p = jax.nn.sigmoid(pred_cls[b])
        tp = jnp.clip(p, EPS, 1.0 - EPS)
        is_one = (lab.astype(jnp.float32) == 1.0)
        pt = jnp.where(is_one, tp, 1.0 - tp)
        cls_loss = jnp.mean((1 - pt) ** FOCAL_GAMMA *
                            jnp.where(is_one, FOCAL_ALPHA, 1 - FOCAL_ALPHA) *
                            (-jnp.log(pt)))
        # smooth l1
        d = pred_boxes[b] - boxes[b]
        ad = jnp.abs(d)
        sl1 = jnp.where(ad < 1.0, 0.5 * d * d, ad - 0.5)
        box_loss = jnp.sum(sl1 * posf) / (jnp.maximum(num_pos, 1.0) * 4.0)
        # dice (instance mode over positive rows)
        proto_f = proto[b].reshape(P, HW)
        pm = jnp.matmul(pred_masks[b], proto_f,
                        precision=jax.lax.Precision.HIGHEST)
        mflat = masks[b].reshape(-1, HW)
        inter = jnp.sum(pm * mflat * posf)
        union = jnp.sum(pm * posf) + jnp.sum(mflat * posf)
        mask_loss = 1.0 - (2.0 * inter + DICE_SMOOTH) / (union + DICE_SMOOTH)
        # proto bce with logits (mean)
        x, y = proto_f, mflat
        proto_loss = jnp.mean(jnp.maximum(x, 0.0) - x * y +
                              jnp.log(1.0 + jnp.exp(-jnp.abs(x))))
        # semantic CE over anchor axis, ignore_index=255
        logits = pred_cls[b]
        z = logits - jnp.max(logits, axis=0, keepdims=True)
        logp = z - jnp.log(jnp.sum(jnp.exp(z), axis=0, keepdims=True))
        nll = -logp[lab, jnp.arange(C)]
        valid = (lab != 255).astype(jnp.float32)
        sem_loss = jnp.sum(nll * valid) / jnp.maximum(jnp.sum(valid), 1.0)

        acc['loss_cls'] += jnp.where(gate, cls_loss * W_CLS, 0.0)
        acc['loss_box'] += jnp.where(gate, box_loss * W_BOX, 0.0)
        acc['loss_mask'] += jnp.where(gate, mask_loss * W_MASK, 0.0)
        acc['loss_proto'] += jnp.where(gate, proto_loss * W_PROTO, 0.0)
        acc['loss_semantic'] += jnp.where(gate, sem_loss * W_SEM, 0.0)
    out = {k: v / B for k, v in acc.items()}
    out['loss'] = (out['loss_cls'] + out['loss_box'] + out['loss_mask'] +
                   out['loss_proto'] + out['loss_semantic'])
    return out


if __name__ == "__main__":
    # The reference module requires N == M == num_classes == num_protos.
    B, N, C, P, H, W = 2, 8, 8, 8, 32, 32
    M = N
    key = jax.random.PRNGKey(0)
    k = jax.random.split(key, 7)
    pred_cls = jax.random.normal(k[0], (B, N, C), jnp.float32)
    pred_boxes = jax.random.uniform(k[1], (B, N, 4), jnp.float32)
    pred_masks = jax.random.normal(k[2], (B, N, P), jnp.float32) * 0.1
    proto_out = jax.random.normal(k[3], (B, P, H, W), jnp.float32) * 0.5
    labels = jax.random.randint(k[4], (B, M), 0, C)
    labels = labels.at[0, 0].set(1)   # batch 0: guaranteed positives
    labels = labels.at[1, :].set(0)   # batch 1: no positives -> exercises the gate
    boxes = jax.random.uniform(k[5], (B, M, 4), jnp.float32)
    masks = (jax.random.uniform(k[6], (B, M, H, W)) > 0.5).astype(jnp.float32)

    ref = yolact_loss_ref(pred_cls, pred_boxes, pred_masks, proto_out,
                          labels, boxes, masks)

    # run both the multi-step HW accumulation path (HW=1024, tile=256 -> 4
    # steps) and the single full-HW-step path (default generation-aware tile).
    for max_tile in (256, None):
        losses = yolact_loss_pallas(pred_cls, pred_boxes, pred_masks, proto_out,
                                    labels, boxes, masks, max_hw_tile=max_tile)
        for v in losses.values():
            jax.block_until_ready(v)
        for name in ['loss_cls', 'loss_box', 'loss_mask', 'loss_proto',
                     'loss_semantic', 'loss']:
            a, b_ = float(losses[name]), float(ref[name])
            assert abs(a - b_) <= 2e-3 + 2e-3 * abs(b_), \
                f"{name} (max_tile={max_tile}): pallas={a} ref={b_}"

    print("KERNEL_OK")
</pallas_src>

<mosaic_0001>
module attributes {stable_mosaic.version = 11 : i64} {
  func.func @kernel(%arg0: i32, %arg1: i32, %arg2: memref<1x8x8xf32, #tpu.memory_space<vmem>>, %arg3: memref<1x8x4xf32, #tpu.memory_space<vmem>>, %arg4: memref<1x8x8xf32, #tpu.memory_space<vmem>>, %arg5: memref<1x1x8xi32, #tpu.memory_space<vmem>>, %arg6: memref<1x8x1xf32, #tpu.memory_space<vmem>>, %arg7: memref<1x8x4xf32, #tpu.memory_space<vmem>>, %arg8: memref<1x8x256xf32, #tpu.memory_space<vmem>>, %arg9: memref<1x8x256xf32, #tpu.memory_space<vmem>>, %arg10: memref<1x8x128xf32, #tpu.memory_space<vmem>>, %arg11: memref<8x8xf32, #tpu.memory_space<vmem>>, %arg12: memref<8x1xf32, #tpu.memory_space<vmem>>, %arg13: memref<8x1xf32, #tpu.memory_space<vmem>>, %arg14: memref<8x1xf32, #tpu.memory_space<vmem>>) attributes {dimension_semantics = [#tpu.dimension_semantics<parallel>, #tpu.dimension_semantics<arbitrary>], iteration_bounds = array<i64: 2, 4>, scalar_prefetch = 0 : i64, scratch_operands = 4 : i64, tpu.core_type = #tpu.core_type<tc>, window_params = [{transform_indices = @transform_0, window_bounds = array<i64: 1, 8, 8>}, {transform_indices = @transform_1, window_bounds = array<i64: 1, 8, 4>}, {transform_indices = @transform_2, window_bounds = array<i64: 1, 8, 8>}, {transform_indices = @transform_3, window_bounds = array<i64: 1, 1, 8>}, {transform_indices = @transform_4, window_bounds = array<i64: 1, 8, 1>}, {transform_indices = @transform_5, window_bounds = array<i64: 1, 8, 4>}, {transform_indices = @transform_6, window_bounds = array<i64: 1, 8, 256>}, {transform_indices = @transform_7, window_bounds = array<i64: 1, 8, 256>}, {transform_indices = @transform_8, window_bounds = array<i64: 1, 8, 128>}]} {
    %c0_i32 = arith.constant 0 : i32
    %0 = arith.cmpi eq, %arg1, %c0_i32 : i32
    %1 = arith.extui %0 : i1 to i32
    %c0_i32_0 = arith.constant 0 : i32
    %2 = arith.cmpi ne, %1, %c0_i32_0 : i32
    scf.if %2 {
      %cst_29 = arith.constant 0.000000e+00 : f32
      %39 = vector.broadcast %cst_29 : f32 to vector<8x8xf32>
      %c0_30 = arith.constant 0 : index
      %c0_31 = arith.constant 0 : index
      %40 = vector.load %arg11[%c0_30, %c0_31] : memref<8x8xf32, #tpu.memory_space<vmem>>, vector<8x8xf32>
      tpu.vector_store %arg11[%c0_30, %c0_31], %39 {strides = array<i32>} : memref<8x8xf32, #tpu.memory_space<vmem>>, vector<8x8xf32>,
      %cst_32 = arith.constant 0.000000e+00 : f32
      %41 = vector.broadcast %cst_32 : f32 to vector<8x1xf32>
      %c0_33 = arith.constant 0 : index
      %c0_34 = arith.constant 0 : index
      %42 = vector.load %arg12[%c0_33, %c0_34] : memref<8x1xf32, #tpu.memory_space<vmem>>, vector<8x1xf32>
      tpu.vector_store %arg12[%c0_33, %c0_34], %41 {strides = array<i32>} : memref<8x1xf32, #tpu.memory_space<vmem>>, vector<8x1xf32>,
      %cst_35 = arith.constant 0.000000e+00 : f32
      %43 = vector.broadcast %cst_35 : f32 to vector<8x1xf32>
      %c0_36 = arith.constant 0 : index
      %c0_37 = arith.constant 0 : index
      %44 = vector.load %arg13[%c0_36, %c0_37] : memref<8x1xf32, #tpu.memory_space<vmem>>, vector<8x1xf32>
      tpu.vector_store %arg13[%c0_36, %c0_37], %43 {strides = array<i32>} : memref<8x1xf32, #tpu.memory_space<vmem>>, vector<8x1xf32>,
      %cst_38 = arith.constant 0.000000e+00 : f32
      %45 = vector.broadcast %cst_38 : f32 to vector<8x1xf32>
      %c0_39 = arith.constant 0 : index
      %c0_40 = arith.constant 0 : index
      %46 = vector.load %arg14[%c0_39, %c0_40] : memref<8x1xf32, #tpu.memory_space<vmem>>, vector<8x1xf32>
      tpu.vector_store %arg14[%c0_39, %c0_40], %45 {strides = array<i32>} : memref<8x1xf32, #tpu.memory_space<vmem>>, vector<8x1xf32>,
    } else {
    }
    %c0 = arith.constant 0 : index
    %c0_1 = arith.constant 0 : index
    %c0_2 = arith.constant 0 : index
    %3 = vector.load %arg8[%c0, %c0_1, %c0_2] : memref<1x8x256xf32, #tpu.memory_space<vmem>>, vector<1x8x256xf32>
    %4 = vector.shape_cast %3 : vector<1x8x256xf32> to vector<8x256xf32>
    %c0_3 = arith.constant 0 : index
    %c0_4 = arith.constant 0 : index
    %c0_5 = arith.constant 0 : index
    %5 = vector.load %arg9[%c0_3, %c0_4, %c0_5] : memref<1x8x256xf32, #tpu.memory_space<vmem>>, vector<1x8x256xf32>
    %6 = vector.shape_cast %5 : vector<1x8x256xf32> to vector<8x256xf32>
    %c0_6 = arith.constant 0 : index
    %c0_7 = arith.constant 0 : index
    %7 = vector.load %arg11[%c0_6, %c0_7] : memref<8x8xf32, #tpu.memory_space<vmem>>, vector<8x8xf32>
    %cst = arith.constant dense<0.000000e+00> : vector<8x8xf32>
    %8 = tpu.matmul %4, %6, %cst {dimension_numbers = #tpu.dot_dimension_numbers<[1], [1], [0], [0], [0, 0, 1, 0], [], []>} : vector<8x256xf32>, vector<8x256xf32>, vector<8x8xf32> -> vector<8x8xf32>
    %9 = arith.addf %7, %8 : vector<8x8xf32>
    %c0_8 = arith.constant 0 : index
    %c0_9 = arith.constant 0 : index
    %10 = vector.load %arg11[%c0_8, %c0_9] : memref<8x8xf32, #tpu.memory_space<vmem>>, vector<8x8xf32>
    tpu.vector_store %arg11[%c0_8, %c0_9], %9 {strides = array<i32>} : memref<8x8xf32, #tpu.memory_space<vmem>>, vector<8x8xf32>,
    %c0_10 = arith.constant 0 : index
    %c0_11 = arith.constant 0 : index
    %11 = vector.load %arg12[%c0_10, %c0_11] : memref<8x1xf32, #tpu.memory_space<vmem>>, vector<8x1xf32>
    %cst_12 = arith.constant dense<0.000000e+00> : vector<8xf32>
    %12 = vector.multi_reduction <add>, %4, %cst_12 [1] : vector<8x256xf32> to vector<8xf32>
    %13 = vector.shape_cast %12 : vector<8xf32> to vector<8x1xf32>
    %14 = arith.addf %11, %13 : vector<8x1xf32>
    %c0_13 = arith.constant 0 : index
    %c0_14 = arith.constant 0 : index
    %15 = vector.load %arg12[%c0_13, %c0_14] : memref<8x1xf32, #tpu.memory_space<vmem>>, vector<8x1xf32>
    tpu.vector_store %arg12[%c0_13, %c0_14], %14 {strides = array<i32>} : memref<8x1xf32, #tpu.memory_space<vmem>>, vector<8x1xf32>,
    %c0_15 = arith.constant 0 : index
    %c0_16 = arith.constant 0 : index
    %16 = vector.load %arg13[%c0_15, %c0_16] : memref<8x1xf32, #tpu.memory_space<vmem>>, vector<8x1xf32>
    %cst_17 = arith.constant dense<0.000000e+00> : vector<8xf32>
    %17 = vector.multi_reduction <add>, %6, %cst_17 [1] : vector<8x256xf32> to vector<8xf32>
    %18 = vector.shape_cast %17 : vector<8xf32> to vector<8x1xf32>
    %19 = arith.addf %16, %18 : vector<8x1xf32>
    %c0_18 = arith.constant 0 : index
    %c0_19 = arith.constant 0 : index
    %20 = vector.load %arg13[%c0_18, %c0_19] : memref<8x1xf32, #tpu.memory_space<vmem>>, vector<8x1xf32>
    tpu.vector_store %arg13[%c0_18, %c0_19], %19 {strides = array<i32>} : memref<8x1xf32, #tpu.memory_space<vmem>>, vector<8x1xf32>,
    %c0_20 = arith.constant 0 : index
    %c0_21 = arith.constant 0 : index
    %21 = vector.load %arg14[%c0_20, %c0_21] : memref<8x1xf32, #tpu.memory_space<vmem>>, vector<8x1xf32>
    %cst_22 = arith.constant 0.000000e+00 : f32
    %22 = vector.broadcast %cst_22 : f32 to vector<8x256xf32>
    %23 = arith.maximumf %4, %22 : vector<8x256xf32>
    %24 = math.absf %4 : vector<8x256xf32>
    %cst_23 = arith.constant 0.000000e+00 : f32
    %25 = vector.broadcast %cst_23 : f32 to vector<8x256xf32>
    %26 = arith.subf %25, %24 : vector<8x256xf32>
    %27 = math.exp %26 : vector<8x256xf32>
    %cst_24 = arith.constant 1.000000e+00 : f32
    %28 = vector.broadcast %cst_24 : f32 to vector<8x256xf32>
    %29 = arith.addf %28, %27 : vector<8x256xf32>
    %30 = math.log %29 : vector<8x256xf32>
    %31 = arith.addf %23, %30 : vector<8x256xf32>
    %cst_25 = arith.constant dense<0.000000e+00> : vector<8xf32>
    %32 = vector.multi_reduction <add>, %31, %cst_25 [1] : vector<8x256xf32> to vector<8xf32>
    %33 = vector.shape_cast %32 : vector<8xf32> to vector<8x1xf32>
    %34 = arith.addf %21, %33 : vector<8x1xf32>
    %c0_26 = arith.constant 0 : index
    %c0_27 = arith.constant 0 : index
    %35 = vector.load %arg14[%c0_26, %c0_27] : memref<8x1xf32, #tpu.memory_space<vmem>>, vector<8x1xf32>
    tpu.vector_store %arg14[%c0_26, %c0_27], %34 {strides = array<i32>} : memref<8x1xf32, #tpu.memory_space<vmem>>, vector<8x1xf32>,
    %c3_i32 = arith.constant 3 : i32
    %36 = arith.cmpi eq, %arg1, %c3_i32 : i32
    %37 = arith.extui %36 : i1 to i32
    %c0_i32_28 = arith.constant 0 : i32
    %38 = arith.cmpi ne, %37, %c0_i32_28 : i32
    scf.if %38 {
      %c0_29 = arith.constant 0 : index
      %c0_30 = arith.constant 0 : index
      %c0_31 = arith.constant 0 : index
      %39 = vector.load %arg2[%c0_29, %c0_30, %c0_31] : memref<1x8x8xf32, #tpu.memory_space<vmem>>, vector<1x8x8xf32>
      %40 = vector.shape_cast %39 : vector<1x8x8xf32> to vector<8x8xf32>
      %c0_32 = arith.constant 0 : index
      %c0_33 = arith.constant 0 : index
      %c0_34 = arith.constant 0 : index
      %41 = vector.load %arg3[%c0_32, %c0_33, %c0_34] : memref<1x8x4xf32, #tpu.memory_space<vmem>>, vector<1x8x4xf32>
      %42 = vector.shape_cast %41 : vector<1x8x4xf32> to vector<8x4xf32>
      %c0_35 = arith.constant 0 : index
      %c0_36 = arith.constant 0 : index
      %c0_37 = arith.constant 0 : index
      %43 = vector.load %arg4[%c0_35, %c0_36, %c0_37] : memref<1x8x8xf32, #tpu.memory_space<vmem>>, vector<1x8x8xf32>
      %44 = vector.shape_cast %43 : vector<1x8x8xf32> to vector<8x8xf32>
      %c0_38 = arith.constant 0 : index
      %c0_39 = arith.constant 0 : index
      %c0_40 = arith.constant 0 : index
      %45 = vector.load %arg5[%c0_38, %c0_39, %c0_40] : memref<1x1x8xi32, #tpu.memory_space<vmem>>, vector<1x1x8xi32>
      %46 = vector.shape_cast %45 : vector<1x1x8xi32> to vector<1x8xi32>
      %c0_41 = arith.constant 0 : index
      %c0_42 = arith.constant 0 : index
      %c0_43 = arith.constant 0 : index
      %47 = vector.load %arg6[%c0_41, %c0_42, %c0_43] : memref<1x8x1xf32, #tpu.memory_space<vmem>>, vector<1x8x1xf32>
      %48 = vector.shape_cast %47 : vector<1x8x1xf32> to vector<8x1xf32>
      %c0_44 = arith.constant 0 : index
      %c0_45 = arith.constant 0 : index
      %c0_46 = arith.constant 0 : index
      %49 = vector.load %arg7[%c0_44, %c0_45, %c0_46] : memref<1x8x4xf32, #tpu.memory_space<vmem>>, vector<1x8x4xf32>
      %50 = vector.shape_cast %49 : vector<1x8x4xf32> to vector<8x4xf32>
      %51 = arith.sitofp %46 : vector<1x8xi32> to vector<1x8xf32>
      %c0_i32_47 = arith.constant 0 : i32
      %52 = vector.broadcast %c0_i32_47 : i32 to vector<1x8xi32>
      %53 = arith.cmpi sgt, %46, %52 : vector<1x8xi32>
      %54 = arith.extui %53 : vector<1x8xi1> to vector<1x8xi32>
      %55 = arith.sitofp %54 : vector<1x8xi32> to vector<1x8xf32>
      %cst_48 = arith.constant dense<0.000000e+00> : vector<1xf32>
      %56 = vector.multi_reduction <add>, %48, %cst_48 [0] : vector<8x1xf32> to vector<1xf32>
      %57 = vector.shape_cast %56 : vector<1xf32> to vector<1x1xf32>
      %cst_49 = arith.constant 0.000000e+00 : f32
      %58 = vector.broadcast %cst_49 : f32 to vector<1x1xf32>
      %59 = arith.cmpf ogt, %57, %58 : vector<1x1xf32>
      %60 = arith.negf %40 : vector<8x8xf32>
      %61 = math.exp %60 : vector<8x8xf32>
      %cst_50 = arith.constant 1.000000e+00 : f32
      %62 = vector.broadcast %cst_50 : f32 to vector<8x8xf32>
      %63 = arith.addf %62, %61 : vector<8x8xf32>
      %64 = arith.divf %62, %63 : vector<8x8xf32>
      %cst_51 = arith.constant 9.99999997E-7 : f32
      %cst_52 = arith.constant 0.999998986 : f32
      %65 = vector.broadcast %cst_51 : f32 to vector<8x8xf32>
      %66 = arith.maximumf %65, %64 : vector<8x8xf32>
      %67 = vector.broadcast %cst_52 : f32 to vector<8x8xf32>
      %68 = arith.minimumf %67, %66 : vector<8x8xf32>
      %cst_53 = arith.constant 1.000000e+00 : f32
      %69 = vector.broadcast %cst_53 : f32 to vector<1x8xf32>
      %70 = arith.cmpf oeq, %51, %69 : vector<1x8xf32>
      %cst_54 = arith.constant 1.000000e+00 : f32
      %71 = vector.broadcast %cst_54 : f32 to vector<8x8xf32>
      %72 = arith.subf %71, %68 : vector<8x8xf32>
      %73 = vector.shape_cast %70 : vector<1x8xi1> to vector<1x8xi1>
      %74 = vector.broadcast %73 : vector<1x8xi1> to vector<8x8xi1>
      %75 = arith.select %74, %68, %72 : vector<8x8xi1>, vector<8x8xf32>
      %cst_55 = arith.constant 1.000000e+00 : f32
      %76 = vector.broadcast %cst_55 : f32 to vector<8x8xf32>
      %77 = arith.subf %76, %75 : vector<8x8xf32>
      %78 = arith.mulf %77, %77 : vector<8x8xf32>
      %cst_56 = arith.constant 2.500000e-01 : f32
      %cst_57 = arith.constant 7.500000e-01 : f32
      %79 = vector.broadcast %cst_56 : f32 to vector<1x8xf32>
      %80 = vector.broadcast %cst_57 : f32 to vector<1x8xf32>
      %81 = arith.select %70, %79, %80 : vector<1x8xi1>, vector<1x8xf32>
      %82 = vector.broadcast %81 : vector<1x8xf32> to vector<8x8xf32>
      %83 = arith.mulf %78, %82 : vector<8x8xf32>
      %84 = math.log %75 : vector<8x8xf32>
      %cst_58 = arith.constant 0.000000e+00 : f32
      %85 = vector.broadcast %cst_58 : f32 to vector<8x8xf32>
      %86 = arith.subf %85, %84 : vector<8x8xf32>
      %87 = arith.mulf %83, %86 : vector<8x8xf32>
      %cst_59 = arith.constant dense<0.000000e+00> : vector<8xf32>
      %88 = vector.multi_reduction <add>, %87, %cst_59 [1] : vector<8x8xf32> to vector<8xf32>
      %89 = vector.shape_cast %88 : vector<8xf32> to vector<8x1xf32>
      %cst_60 = arith.constant dense<0.000000e+00> : vector<1xf32>
      %90 = vector.multi_reduction <add>, %89, %cst_60 [0] : vector<8x1xf32> to vector<1xf32>
      %91 = vector.shape_cast %90 : vector<1xf32> to vector<1x1xf32>
      %cst_61 = arith.constant 1.562500e-02 : f32
      %92 = vector.broadcast %cst_61 : f32 to vector<1x1xf32>
      %93 = arith.mulf %91, %92 : vector<1x1xf32>
      %94 = arith.subf %42, %50 : vector<8x4xf32>
      %95 = math.absf %94 : vector<8x4xf32>
      %cst_62 = arith.constant 1.000000e+00 : f32
      %96 = vector.broadcast %cst_62 : f32 to vector<8x4xf32>
      %97 = arith.cmpf olt, %95, %96 : vector<8x4xf32>
      %cst_63 = arith.constant 5.000000e-01 : f32
      %98 = vector.broadcast %cst_63 : f32 to vector<8x4xf32>
      %99 = arith.mulf %98, %94 : vector<8x4xf32>
      %100 = arith.mulf %99, %94 : vector<8x4xf32>
      %cst_64 = arith.constant 5.000000e-01 : f32
      %101 = vector.broadcast %cst_64 : f32 to vector<8x4xf32>
      %102 = arith.subf %95, %101 : vector<8x4xf32>
      %103 = arith.select %97, %100, %102 : vector<8x4xi1>, vector<8x4xf32>
      %104 = vector.broadcast %48 : vector<8x1xf32> to vector<8x4xf32>
      %105 = arith.mulf %103, %104 : vector<8x4xf32>
      %cst_65 = arith.constant dense<0.000000e+00> : vector<8xf32>
      %106 = vector.multi_reduction <add>, %105, %cst_65 [1] : vector<8x4xf32> to vector<8xf32>
      %107 = vector.shape_cast %106 : vector<8xf32> to vector<8x1xf32>
      %cst_66 = arith.constant dense<0.000000e+00> : vector<1xf32>
      %108 = vector.multi_reduction <add>, %107, %cst_66 [0] : vector<8x1xf32> to vector<1xf32>
      %109 = vector.shape_cast %108 : vector<1xf32> to vector<1x1xf32>
      %cst_67 = arith.constant 1.000000e+00 : f32
      %110 = vector.broadcast %cst_67 : f32 to vector<1x1xf32>
      %111 = arith.maximumf %57, %110 : vector<1x1xf32>
      %cst_68 = arith.constant 4.000000e+00 : f32
      %112 = vector.broadcast %cst_68 : f32 to vector<1x1xf32>
      %113 = arith.mulf %112, %111 : vector<1x1xf32>
      %114 = arith.divf %109, %113 : vector<1x1xf32>
      %115 = vector.broadcast %55 : vector<1x8xf32> to vector<8x8xf32>
      %116 = arith.mulf %44, %115 : vector<8x8xf32>
      %c0_69 = arith.constant 0 : index
      %c0_70 = arith.constant 0 : index
      %117 = vector.load %arg11[%c0_69, %c0_70] : memref<8x8xf32, #tpu.memory_space<vmem>>, vector<8x8xf32>
      %118 = arith.mulf %116, %117 : vector<8x8xf32>
      %cst_71 = arith.constant dense<0.000000e+00> : vector<8xf32>
      %119 = vector.multi_reduction <add>, %118, %cst_71 [1] : vector<8x8xf32> to vector<8xf32>
      %120 = vector.shape_cast %119 : vector<8xf32> to vector<8x1xf32>
      %cst_72 = arith.constant dense<0.000000e+00> : vector<1xf32>
      %121 = vector.multi_reduction <add>, %120, %cst_72 [0] : vector<8x1xf32> to vector<1xf32>
      %122 = vector.shape_cast %121 : vector<1xf32> to vector<1x1xf32>
      %cst_73 = arith.constant dense<0.000000e+00> : vector<8xf32>
      %123 = vector.multi_reduction <add>, %116, %cst_73 [1] : vector<8x8xf32> to vector<8xf32>
      %124 = vector.shape_cast %123 : vector<8xf32> to vector<8x1xf32>
      %c0_74 = arith.constant 0 : index
      %c0_75 = arith.constant 0 : index
      %125 = vector.load %arg12[%c0_74, %c0_75] : memref<8x1xf32, #tpu.memory_space<vmem>>, vector<8x1xf32>
      %126 = arith.mulf %125, %124 : vector<8x1xf32>
      %cst_76 = arith.constant dense<0.000000e+00> : vector<8xf32>
      %127 = vector.multi_reduction <add>, %126, %cst_76 [1] : vector<8x1xf32> to vector<8xf32>
      %128 = vector.shape_cast %127 : vector<8xf32> to vector<8x1xf32>
      %cst_77 = arith.constant dense<0.000000e+00> : vector<1xf32>
      %129 = vector.multi_reduction <add>, %128, %cst_77 [0] : vector<8x1xf32> to vector<1xf32>
      %130 = vector.shape_cast %129 : vector<1xf32> to vector<1x1xf32>
      %c0_78 = arith.constant 0 : index
      %c0_79 = arith.constant 0 : index
      %131 = vector.load %arg13[%c0_78, %c0_79] : memref<8x1xf32, #tpu.memory_space<vmem>>, vector<8x1xf32>
      %132 = arith.mulf %131, %48 : vector<8x1xf32>
      %cst_80 = arith.constant dense<0.000000e+00> : vector<8xf32>
      %133 = vector.multi_reduction <add>, %132, %cst_80 [1] : vector<8x1xf32> to vector<8xf32>
      %134 = vector.shape_cast %133 : vector<8xf32> to vector<8x1xf32>
      %cst_81 = arith.constant dense<0.000000e+00> : vector<1xf32>
      %135 = vector.multi_reduction <add>, %134, %cst_81 [0] : vector<8x1xf32> to vector<1xf32>
      %136 = vector.shape_cast %135 : vector<1xf32> to vector<1x1xf32>
      %cst_82 = arith.constant 2.000000e+00 : f32
      %137 = vector.broadcast %cst_82 : f32 to vector<1x1xf32>
      %138 = arith.mulf %137, %122 : vector<1x1xf32>
      %cst_83 = arith.constant 9.99999997E-7 : f32
      %139 = vector.broadcast %cst_83 : f32 to vector<1x1xf32>
      %140 = arith.addf %138, %139 : vector<1x1xf32>
      %141 = arith.addf %130, %136 : vector<1x1xf32>
      %cst_84 = arith.constant 9.99999997E-7 : f32
      %142 = vector.broadcast %cst_84 : f32 to vector<1x1xf32>
      %143 = arith.addf %141, %142 : vector<1x1xf32>
      %144 = arith.divf %140, %143 : vector<1x1xf32>
      %cst_85 = arith.constant 1.000000e+00 : f32
      %145 = vector.broadcast %cst_85 : f32 to vector<1x1xf32>
      %146 = arith.subf %145, %144 : vector<1x1xf32>
      %147 = tpu.iota {dimensions = array<i32: 0>} : vector<8x8xi32>
      %148 = tpu.iota {dimensions = array<i32: 1>} : vector<8x8xi32>
      %149 = arith.cmpi eq, %147, %148 : vector<8x8xi32>
      %c0_86 = arith.constant 0 : index
      %c0_87 = arith.constant 0 : index
      %150 = vector.load %arg11[%c0_86, %c0_87] : memref<8x8xf32, #tpu.memory_space<vmem>>, vector<8x8xf32>
      %cst_88 = arith.constant 0.000000e+00 : f32
      %151 = vector.broadcast %cst_88 : f32 to vector<8x8xf32>
      %152 = arith.select %149, %150, %151 : vector<8x8xi1>, vector<8x8xf32>
      %cst_89 = arith.constant dense<0.000000e+00> : vector<8xf32>
      %153 = vector.multi_reduction <add>, %152, %cst_89 [1] : vector<8x8xf32> to vector<8xf32>
      %154 = vector.shape_cast %153 : vector<8xf32> to vector<8x1xf32>
      %cst_90 = arith.constant dense<0.000000e+00> : vector<1xf32>
      %155 = vector.multi_reduction <add>, %154, %cst_90 [0] : vector<8x1xf32> to vector<1xf32>
      %156 = vector.shape_cast %155 : vector<1xf32> to vector<1x1xf32>
      %c0_91 = arith.constant 0 : index
      %c0_92 = arith.constant 0 : index
      %157 = vector.load %arg14[%c0_91, %c0_92] : memref<8x1xf32, #tpu.memory_space<vmem>>, vector<8x1xf32>
      %cst_93 = arith.constant dense<0.000000e+00> : vector<1xf32>
      %158 = vector.multi_reduction <add>, %157, %cst_93 [0] : vector<8x1xf32> to vector<1xf32>
      %159 = vector.shape_cast %158 : vector<1xf32> to vector<1x1xf32>
      %160 = arith.subf %159, %156 : vector<1x1xf32>
      %cst_94 = arith.constant 1.22070313E-4 : f32
      %161 = vector.broadcast %cst_94 : f32 to vector<1x1xf32>
      %162 = arith.mulf %160, %161 : vector<1x1xf32>
      %cst_95 = arith.constant dense<0xFF800000> : vector<8xf32>
      %163 = vector.multi_reduction <maximumf>, %40, %cst_95 [0] : vector<8x8xf32> to vector<8xf32>
      %164 = vector.shape_cast %163 : vector<8xf32> to vector<1x8xf32>
      %165 = vector.broadcast %164 : vector<1x8xf32> to vector<8x8xf32>
      %166 = arith.subf %40, %165 : vector<8x8xf32>
      %167 = math.exp %166 : vector<8x8xf32>
      %cst_96 = arith.constant dense<0.000000e+00> : vector<8xf32>
      %168 = vector.multi_reduction <add>, %167, %cst_96 [0] : vector<8x8xf32> to vector<8xf32>
      %169 = vector.shape_cast %168 : vector<8xf32> to vector<1x8xf32>
      %170 = math.log %169 : vector<1x8xf32>
      %171 = vector.broadcast %170 : vector<1x8xf32> to vector<8x8xf32>
      %172 = arith.subf %166, %171 : vector<8x8xf32>
      %173 = tpu.iota {dimensions = array<i32: 0>} : vector<8x8xi32>
      %174 = vector.broadcast %46 : vector<1x8xi32> to vector<8x8xi32>
      %175 = arith.cmpi eq, %173, %174 : vector<8x8xi32>
      %176 = arith.extui %175 : vector<8x8xi1> to vector<8x8xi32>
      %177 = arith.sitofp %176 : vector<8x8xi32> to vector<8x8xf32>
      %178 = arith.mulf %177, %172 : vector<8x8xf32>
      %cst_97 = arith.constant dense<0.000000e+00> : vector<8xf32>
      %179 = vector.multi_reduction <add>, %178, %cst_97 [0] : vector<8x8xf32> to vector<8xf32>
      %180 = vector.shape_cast %179 : vector<8xf32> to vector<1x8xf32>
      %cst_98 = arith.constant 0.000000e+00 : f32
      %181 = vector.broadcast %cst_98 : f32 to vector<1x8xf32>
      %182 = arith.subf %181, %180 : vector<1x8xf32>
      %c255_i32 = arith.constant 255 : i32
      %183 = vector.broadcast %c255_i32 : i32 to vector<1x8xi32>
      %184 = arith.cmpi ne, %46, %183 : vector<1x8xi32>
      %185 = arith.extui %184 : vector<1x8xi1> to vector<1x8xi32>
      %186 = arith.sitofp %185 : vector<1x8xi32> to vector<1x8xf32>
      %cst_99 = arith.constant dense<0.000000e+00> : vector<1xf32>
      %187 = vector.multi_reduction <add>, %186, %cst_99 [1] : vector<1x8xf32> to vector<1xf32>
      %188 = vector.shape_cast %187 : vector<1xf32> to vector<1x1xf32>
      %189 = arith.mulf %182, %186 : vector<1x8xf32>
      %cst_100 = arith.constant dense<0.000000e+00> : vector<1xf32>
      %190 = vector.multi_reduction <add>, %189, %cst_100 [1] : vector<1x8xf32> to vector<1xf32>
      %191 = vector.shape_cast %190 : vector<1xf32> to vector<1x1xf32>
      %cst_101 = arith.constant 1.000000e+00 : f32
      %192 = vector.broadcast %cst_101 : f32 to vector<1x1xf32>
      %193 = arith.maximumf %188, %192 : vector<1x1xf32>
      %194 = arith.divf %191, %193 : vector<1x1xf32>
      %cst_102 = arith.constant 0.000000e+00 : f32
      %195 = vector.broadcast %cst_102 : f32 to vector<1x1xf32>
      %cst_103 = arith.constant 1.000000e+00 : f32
      %196 = vector.broadcast %cst_103 : f32 to vector<1x1xf32>
      %197 = arith.mulf %93, %196 : vector<1x1xf32>
      %198 = arith.select %59, %197, %195 : vector<1x1xi1>, vector<1x1xf32>
      %cst_104 = arith.constant 1.500000e+00 : f32
      %199 = vector.broadcast %cst_104 : f32 to vector<1x1xf32>
      %200 = arith.mulf %114, %199 : vector<1x1xf32>
      %201 = arith.select %59, %200, %195 : vector<1x1xi1>, vector<1x1xf32>
      %cst_105 = arith.constant 6.125000e+00 : f32
      %202 = vector.broadcast %cst_105 : f32 to vector<1x1xf32>
      %203 = arith.mulf %146, %202 : vector<1x1xf32>
      %204 = arith.select %59, %203, %195 : vector<1x1xi1>, vector<1x1xf32>
      %cst_106 = arith.constant 1.000000e+00 : f32
      %205 = vector.broadcast %cst_106 : f32 to vector<1x1xf32>
      %206 = arith.mulf %162, %205 : vector<1x1xf32>
      %207 = arith.select %59, %206, %195 : vector<1x1xi1>, vector<1x1xf32>
      %cst_107 = arith.constant 1.000000e+00 : f32
      %208 = vector.broadcast %cst_107 : f32 to vector<1x1xf32>
      %209 = arith.mulf %194, %208 : vector<1x1xf32>
      %210 = arith.select %59, %209, %195 : vector<1x1xi1>, vector<1x1xf32>
      %211 = tpu.iota {dimensions = array<i32: 0>} : vector<8x128xi32>
      %c0_i32_108 = arith.constant 0 : i32
      %212 = vector.broadcast %c0_i32_108 : i32 to vector<8x128xi32>
      %213 = arith.cmpi eq, %211, %212 : vector<8x128xi32>
      %cst_109 = arith.constant 0.000000e+00 : f32
      %214 = vector.shape_cast %198 : vector<1x1xf32> to vector<1x1xf32>
      %215 = vector.broadcast %214 : vector<1x1xf32> to vector<8x128xf32>
      %216 = vector.broadcast %cst_109 : f32 to vector<8x128xf32>
      %217 = arith.select %213, %215, %216 : vector<8x128xi1>, vector<8x128xf32>
      %c1_i32 = arith.constant 1 : i32
      %218 = vector.broadcast %c1_i32 : i32 to vector<8x128xi32>
      %219 = arith.cmpi eq, %211, %218 : vector<8x128xi32>
      %cst_110 = arith.constant 0.000000e+00 : f32
      %220 = vector.shape_cast %201 : vector<1x1xf32> to vector<1x1xf32>
      %221 = vector.broadcast %220 : vector<1x1xf32> to vector<8x128xf32>
      %222 = vector.broadcast %cst_110 : f32 to vector<8x128xf32>
      %223 = arith.select %219, %221, %222 : vector<8x128xi1>, vector<8x128xf32>
      %224 = arith.addf %217, %223 : vector<8x128xf32>
      %c2_i32 = arith.constant 2 : i32
      %225 = vector.broadcast %c2_i32 : i32 to vector<8x128xi32>
      %226 = arith.cmpi eq, %211, %225 : vector<8x128xi32>
      %cst_111 = arith.constant 0.000000e+00 : f32
      %227 = vector.shape_cast %204 : vector<1x1xf32> to vector<1x1xf32>
      %228 = vector.broadcast %227 : vector<1x1xf32> to vector<8x128xf32>
      %229 = vector.broadcast %cst_111 : f32 to vector<8x128xf32>
      %230 = arith.select %226, %228, %229 : vector<8x128xi1>, vector<8x128xf32>
      %231 = arith.addf %224, %230 : vector<8x128xf32>
      %c3_i32_112 = arith.constant 3 : i32
      %232 = vector.broadcast %c3_i32_112 : i32 to vector<8x128xi32>
      %233 = arith.cmpi eq, %211, %232 : vector<8x128xi32>
      %cst_113 = arith.constant 0.000000e+00 : f32
      %234 = vector.shape_cast %207 : vector<1x1xf32> to vector<1x1xf32>
      %235 = vector.broadcast %234 : vector<1x1xf32> to vector<8x128xf32>
      %236 = vector.broadcast %cst_113 : f32 to vector<8x128xf32>
      %237 = arith.select %233, %235, %236 : vector<8x128xi1>, vector<8x128xf32>
      %238 = arith.addf %231, %237 : vector<8x128xf32>
      %c4_i32 = arith.constant 4 : i32
      %239 = vector.broadcast %c4_i32 : i32 to vector<8x128xi32>
      %240 = arith.cmpi eq, %211, %239 : vector<8x128xi32>
      %cst_114 = arith.constant 0.000000e+00 : f32
      %241 = vector.shape_cast %210 : vector<1x1xf32> to vector<1x1xf32>
      %242 = vector.broadcast %241 : vector<1x1xf32> to vector<8x128xf32>
      %243 = vector.broadcast %cst_114 : f32 to vector<8x128xf32>
      %244 = arith.select %240, %242, %243 : vector<8x128xi1>, vector<8x128xf32>
      %245 = arith.addf %238, %244 : vector<8x128xf32>
      %246 = vector.shape_cast %245 : vector<8x128xf32> to vector<1x8x128xf32>
      %c0_115 = arith.constant 0 : index
      %c0_116 = arith.constant 0 : index
      %c0_117 = arith.constant 0 : index
      %247 = vector.load %arg10[%c0_115, %c0_116, %c0_117] : memref<1x8x128xf32, #tpu.memory_space<vmem>>, vector<1x8x128xf32>
      tpu.vector_store %arg10[%c0_115, %c0_116, %c0_117], %246 {strides = array<i32>} : memref<1x8x128xf32, #tpu.memory_space<vmem>>, vector<1x8x128xf32>,
    } else {
    }
    return
  }
  func.func @transform_0(%arg0: i32, %arg1: i32) -> (i32, i32, i32) {
    %c0_i32 = arith.constant 0 : i32
    %c0_i32_0 = arith.constant 0 : i32
    %c0_i32_1 = arith.constant 0 : i32
    return %arg0, %c0_i32, %c0_i32_0 : i32, i32, i32
  }
  func.func @transform_1(%arg0: i32, %arg1: i32) -> (i32, i32, i32) {
    %c0_i32 = arith.constant 0 : i32
    %c0_i32_0 = arith.constant 0 : i32
    %c0_i32_1 = arith.constant 0 : i32
    return %arg0, %c0_i32, %c0_i32_0 : i32, i32, i32
  }
  func.func @transform_2(%arg0: i32, %arg1: i32) -> (i32, i32, i32) {
    %c0_i32 = arith.constant 0 : i32
    %c0_i32_0 = arith.constant 0 : i32
    %c0_i32_1 = arith.constant 0 : i32
    return %arg0, %c0_i32, %c0_i32_0 : i32, i32, i32
  }
  func.func @transform_3(%arg0: i32, %arg1: i32) -> (i32, i32, i32) {
    %c0_i32 = arith.constant 0 : i32
    %c0_i32_0 = arith.constant 0 : i32
    %c0_i32_1 = arith.constant 0 : i32
    return %arg0, %c0_i32, %c0_i32_0 : i32, i32, i32
  }
  func.func @transform_4(%arg0: i32, %arg1: i32) -> (i32, i32, i32) {
    %c0_i32 = arith.constant 0 : i32
    %c0_i32_0 = arith.constant 0 : i32
    %c0_i32_1 = arith.constant 0 : i32
    return %arg0, %c0_i32, %c0_i32_0 : i32, i32, i32
  }
  func.func @transform_5(%arg0: i32, %arg1: i32) -> (i32, i32, i32) {
    %c0_i32 = arith.constant 0 : i32
    %c0_i32_0 = arith.constant 0 : i32
    %c0_i32_1 = arith.constant 0 : i32
    return %arg0, %c0_i32, %c0_i32_0 : i32, i32, i32
  }
  func.func @transform_6(%arg0: i32, %arg1: i32) -> (i32, i32, i32) {
    %c0_i32 = arith.constant 0 : i32
    %c0_i32_0 = arith.constant 0 : i32
    return %arg0, %c0_i32, %arg1 : i32, i32, i32
  }
  func.func @transform_7(%arg0: i32, %arg1: i32) -> (i32, i32, i32) {
    %c0_i32 = arith.constant 0 : i32
    %c0_i32_0 = arith.constant 0 : i32
    return %arg0, %c0_i32, %arg1 : i32, i32, i32
  }
  func.func @transform_8(%arg0: i32, %arg1: i32) -> (i32, i32, i32) {
    %c0_i32 = arith.constant 0 : i32
    %c0_i32_0 = arith.constant 0 : i32
    %c0_i32_1 = arith.constant 0 : i32
    return %arg0, %c0_i32, %c0_i32_0 : i32, i32, i32
  }
}

</mosaic_0001>

<llo_original>
// kernel: tpu_custom_call.1
$region0: #{tpu_custom_call.1}
  #allocation0 [shape = 'u32[]', space=smem, size = 0x4, offset = 0x4, fixed_abs, tag = 'smem constant byte address 0x4 - core index']
  #allocation1 [shape = 'u32[72,128]{1,0:T(1,128)}', space=vmem, size = 0x9000, scoped, tag = 'internal scratch']
  #allocation2 [shape = 'f32[8,8]{1,0:T(8,128)}', space=vmem, size = 0x1000, scoped, tag = 'scratch operand']
  #allocation3 [shape = 'f32[8,1]{1,0:T(8,128)}', space=vmem, size = 0x1000, scoped, tag = 'scratch operand']
  #allocation4 [shape = 'f32[8,1]{1,0:T(8,128)}', space=vmem, size = 0x1000, scoped, tag = 'scratch operand']
  #allocation5 [shape = 'f32[8,1]{1,0:T(8,128)}', space=vmem, size = 0x1000, scoped, tag = 'scratch operand']
  %s0 = inlined_call_operand.vmem [shape: f32[2,8,8], index: 0, kind: input, shape index: {}]
  %s1 = inlined_call_operand.vmem [shape: f32[2,8,4], index: 1, kind: input, shape index: {}]
  %s2 = inlined_call_operand.vmem [shape: f32[2,8,8], index: 2, kind: input, shape index: {}]
  %s3 = inlined_call_operand.vmem [shape: s32[2,1,8], index: 3, kind: input, shape index: {}]
  %s4 = inlined_call_operand.vmem [shape: f32[2,8,1], index: 4, kind: input, shape index: {}]
  %s5 = inlined_call_operand.vmem [shape: f32[2,8,4], index: 5, kind: input, shape index: {}]
  %s6 = inlined_call_operand.hbm [shape: f32[2,8,1024], index: 6, kind: input, shape index: {}]
  %s7 = inlined_call_operand.hbm [shape: f32[2,8,1024], index: 7, kind: input, shape index: {}]
  %s8 = inlined_call_operand.hbm [shape: f32[2,8,128], index: 8, kind: output, shape index: {}]
  %s9 = sld [smem:[#allocation0]]
  $region81: #{tpu_custom_call.1} parent=0
    _
  %s11 = ssub.s32 1, %s9
  %s12 = scalar_select 0, %s11, %s9
  $region1: #{tpu_custom_call.1} parent=0
    #allocation6 [shape = 'u8[16384]{0}', space=vmem, size = 0x4000, scoped, tag = 'input window, operand 6']
    #allocation7 [shape = 's32[2]{0}', space=sflag, size = 0x8, scoped, tag = 'scoped memory for tpu_custom_call.1']
    #allocation8 [shape = 's32[2]{0}', space=sflag, size = 0x8, scoped, tag = 'scoped memory for tpu_custom_call.1']
    #allocation9 [shape = 'u8[16384]{0}', space=vmem, size = 0x4000, scoped, tag = 'input window, operand 7']
    #allocation10 [shape = 's32[2]{0}', space=sflag, size = 0x8, scoped, tag = 'scoped memory for tpu_custom_call.1']
    #allocation11 [shape = 'u8[8192]{0}', space=vmem, size = 0x2000, scoped, tag = 'output window, operand 0']
    %13 = vsyncpa [#allocation7], 0
    %s14 = scalar_lea.sflag [#allocation7], 1
    %15 = vsyncpa %s14, 0
    %16 = vsyncpa [#allocation10], 0
    %s17 = scalar_lea.sflag [#allocation10], 1
    %18 = vsyncpa %s17, 0
    %19 = vsyncpa [#allocation8], 0
    %s20 = scalar_lea.sflag [#allocation8], 1
    %21 = vsyncpa %s20, 0
    loop: start=0, step=1, limit=10
    $region2: #{tpu_custom_call.1} parent=1 // loop_pre_header
      _
    $region3: #{tpu_custom_call.1} parent=1 // loop_header
      %s23 = sphi 0, %s27
      %p24 = scmp.ge.s32.totalorder %s23, 10
      %s30 = sphi 0, %s42
      %s31 = sphi 0, %s38
      %s32 = sphi 0, %s30
      %s33 = sphi 0, %s31
      %s34 = sphi 0, %s32
      %s35 = sphi 0, %s33
      %s45 = sphi 0, %s47
      %s48 = sphi 0, %s45
      %s49 = sphi 0, %s48
      %s65 = sphi 0, %s49
      %s71 = sphi 0, %s73
      %s74 = sphi 0, %s71
      %s75 = sphi 0, %s74
      %s91 = sphi 0, %s75
      %s97 = sphi 0, %s99
      %s100 = sphi 0, %s97
      %s101 = sphi 0, %s100
      %s117 = sphi 0, %s101
      %s123 = sphi 0, %s125
      %s126 = sphi 0, %s123
      %s127 = sphi 0, %s126
      %s143 = sphi 0, %s127
      %s149 = sphi 0, %s151
      %s152 = sphi 0, %s149
      %s153 = sphi 0, %s152
      %s169 = sphi 0, %s153
      %s175 = sphi 0, %s177
      %s178 = sphi 0, %s175
      %s179 = sphi 0, %s178
      %s195 = sphi 0, %s179
      %s203 = sphi 0, %s205
      %s206 = sphi 0, %s203
      %s207 = sphi 0, %s206
      %s223 = sphi 0, %s207
      %s231 = sphi 0, %s233
      %s234 = sphi 0, %s231
      %s235 = sphi 0, %s234
      %s251 = sphi 0, %s235
      %s257 = sphi 0, %s259
      %s260 = sphi 0, %s257
      %s261 = sphi 0, %s260
      %s277 = sphi 0, %s261
    $region4: #{tpu_custom_call.1} parent=1 // loop_header_branch
      %26 = sbr.rel (%p24) target = $region8
    $region5: #{tpu_custom_call.1} parent=1 // loop_body
      %s28 = ssub.s32 %s23, 1
      %s29 = ssub.s32 %s23, 2
      %s36 = sadd.s32 1, %s31
      %p37 = scmp.ge.s32.totalorder %s36, 4
      %s38 = scalar_select %p37, 0, %s36
      %s39 = sadd.s32 1, %s30
      %s40 = scalar_select %p37, %s39, %s30
      %p41 = scmp.ge.s32.totalorder %s40, 2
      %s42 = scalar_select %p41, 0, %s40
      %s43 = ssub.s32 %s30, %s42
      %p44 = scmp.eq.s32.totalorder %s43, 0
      %s46 = sadd.s32 %s45, 1
      %s47 = scalar_select %p44, %s45, %s46
      %p50 = pneg %p44
      %p51 = scmp.eq.s32.totalorder %s23, 7
      %p52 = por %p50, %p51
      %p53 = scmp.ne.s32.totalorder %s45, %s48
      %p54 = scmp.eq.s32.totalorder %s23, 0
      %p55 = por %p53, %p54
      %p56 = scmp.ne.s32.totalorder %s45, %s48
      %p57 = scmp.eq.s32.totalorder %s28, 7
      %p58 = por %p56, %p57
      %p59 = scmp.ne.s32.totalorder %s48, %s49
      %p60 = scmp.eq.s32.totalorder %s28, 0
      %p61 = por %p59, %p60
      %p62 = scmp.ne.s32.totalorder %s48, %s49
      %p63 = scmp.eq.s32.totalorder %s29, 7
      %p64 = por %p62, %p63
      %p66 = scmp.ne.s32.totalorder %s49, %s65
      %p67 = scmp.eq.s32.totalorder %s29, 0
      %p68 = por %p66, %p67
      %s69 = ssub.s32 %s30, %s42
      %p70 = scmp.eq.s32.totalorder %s69, 0
      %s72 = sadd.s32 %s71, 1
      %s73 = scalar_select %p70, %s71, %s72
      %p76 = pneg %p70
      %p77 = scmp.eq.s32.totalorder %s23, 7
      %p78 = por %p76, %p77
      %p79 = scmp.ne.s32.totalorder %s71, %s74
      %p80 = scmp.eq.s32.totalorder %s23, 0
      %p81 = por %p79, %p80
      %p82 = scmp.ne.s32.totalorder %s71, %s74
      %p83 = scmp.eq.s32.totalorder %s28, 7
      %p84 = por %p82, %p83
      %p85 = scmp.ne.s32.totalorder %s74, %s75
      %p86 = scmp.eq.s32.totalorder %s28, 0
      %p87 = por %p85, %p86
      %p88 = scmp.ne.s32.totalorder %s74, %s75
      %p89 = scmp.eq.s32.totalorder %s29, 7
      %p90 = por %p88, %p89
      %p92 = scmp.ne.s32.totalorder %s75, %s91
      %p93 = scmp.eq.s32.totalorder %s29, 0
      %p94 = por %p92, %p93
      %s95 = ssub.s32 %s30, %s42
      %p96 = scmp.eq.s32.totalorder %s95, 0
      %s98 = sadd.s32 %s97, 1
      %s99 = scalar_select %p96, %s97, %s98
      %p102 = pneg %p96
      %p103 = scmp.eq.s32.totalorder %s23, 7
      %p104 = por %p102, %p103
      %p105 = scmp.ne.s32.totalorder %s97, %s100
      %p106 = scmp.eq.s32.totalorder %s23, 0
      %p107 = por %p105, %p106
      %p108 = scmp.ne.s32.totalorder %s97, %s100
      %p109 = scmp.eq.s32.totalorder %s28, 7
      %p110 = por %p108, %p109
      %p111 = scmp.ne.s32.totalorder %s100, %s101
      %p112 = scmp.eq.s32.totalorder %s28, 0
      %p113 = por %p111, %p112
      %p114 = scmp.ne.s32.totalorder %s100, %s101
      %p115 = scmp.eq.s32.totalorder %s29, 7
      %p116 = por %p114, %p115
      %p118 = scmp.ne.s32.totalorder %s101, %s117
      %p119 = scmp.eq.s32.totalorder %s29, 0
      %p120 = por %p118, %p119
      %s121 = ssub.s32 %s30, %s42
      %p122 = scmp.eq.s32.totalorder %s121, 0
      %s124 = sadd.s32 %s123, 1
      %s125 = scalar_select %p122, %s123, %s124
      %p128 = pneg %p122
      %p129 = scmp.eq.s32.totalorder %s23, 7
      %p130 = por %p128, %p129
      %p131 = scmp.ne.s32.totalorder %s123, %s126
      %p132 = scmp.eq.s32.totalorder %s23, 0
      %p133 = por %p131, %p132
      %p134 = scmp.ne.s32.totalorder %s123, %s126
      %p135 = scmp.eq.s32.totalorder %s28, 7
      %p136 = por %p134, %p135
      %p137 = scmp.ne.s32.totalorder %s126, %s127
      %p138 = scmp.eq.s32.totalorder %s28, 0
      %p139 = por %p137, %p138
      %p140 = scmp.ne.s32.totalorder %s126, %s127
      %p141 = scmp.eq.s32.totalorder %s29, 7
      %p142 = por %p140, %p141
      %p144 = scmp.ne.s32.totalorder %s127, %s143
      %p145 = scmp.eq.s32.totalorder %s29, 0
      %p146 = por %p144, %p145
      %s147 = ssub.s32 %s30, %s42
      %p148 = scmp.eq.s32.totalorder %s147, 0
      %s150 = sadd.s32 %s149, 1
      %s151 = scalar_select %p148, %s149, %s150
      %p154 = pneg %p148
      %p155 = scmp.eq.s32.totalorder %s23, 7
      %p156 = por %p154, %p155
      %p157 = scmp.ne.s32.totalorder %s149, %s152
      %p158 = scmp.eq.s32.totalorder %s23, 0
      %p159 = por %p157, %p158
      %p160 = scmp.ne.s32.totalorder %s149, %s152
      %p161 = scmp.eq.s32.totalorder %s28, 7
      %p162 = por %p160, %p161
      %p163 = scmp.ne.s32.totalorder %s152, %s153
      %p164 = scmp.eq.s32.totalorder %s28, 0
      %p165 = por %p163, %p164
      %p166 = scmp.ne.s32.totalorder %s152, %s153
      %p167 = scmp.eq.s32.totalorder %s29, 7
      %p168 = por %p166, %p167
      %p170 = scmp.ne.s32.totalorder %s153, %s169
      %p171 = scmp.eq.s32.totalorder %s29, 0
      %p172 = por %p170, %p171
      %s173 = ssub.s32 %s30, %s42
      %p174 = scmp.eq.s32.totalorder %s173, 0
      %s176 = sadd.s32 %s175, 1
      %s177 = scalar_select %p174, %s175, %s176
      %p180 = pneg %p174
      %p181 = scmp.eq.s32.totalorder %s23, 7
      %p182 = por %p180, %p181
      %p183 = scmp.ne.s32.totalorder %s175, %s178
      %p184 = scmp.eq.s32.totalorder %s23, 0
      %p185 = por %p183, %p184
      %p186 = scmp.ne.s32.totalorder %s175, %s178
      %p187 = scmp.eq.s32.totalorder %s28, 7
      %p188 = por %p186, %p187
      %p189 = scmp.ne.s32.totalorder %s178, %s179
      %p190 = scmp.eq.s32.totalorder %s28, 0
      %p191 = por %p189, %p190
      %p192 = scmp.ne.s32.totalorder %s178, %s179
      %p193 = scmp.eq.s32.totalorder %s29, 7
      %p194 = por %p192, %p193
      %p196 = scmp.ne.s32.totalorder %s179, %s195
      %p197 = scmp.eq.s32.totalorder %s29, 0
      %p198 = por %p196, %p197
      %s199 = ssub.s32 %s30, %s42
      %s200 = ssub.s32 %s31, %s38
      %s201 = sor.u32 %s199, %s200
      %p202 = scmp.eq.s32.totalorder %s201, 0
      %s204 = sadd.s32 %s203, 1
      %s205 = scalar_select %p202, %s203, %s204
      %p208 = pneg %p202
      %p209 = scmp.eq.s32.totalorder %s23, 7
      %p210 = por %p208, %p209
      %p211 = scmp.ne.s32.totalorder %s203, %s206
      %p212 = scmp.eq.s32.totalorder %s23, 0
      %p213 = por %p211, %p212
      %p214 = scmp.ne.s32.totalorder %s203, %s206
      %p215 = scmp.eq.s32.totalorder %s28, 7
      %p216 = por %p214, %p215
      %p217 = scmp.ne.s32.totalorder %s206, %s207
      %p218 = scmp.eq.s32.totalorder %s28, 0
      %p219 = por %p217, %p218
      %p220 = scmp.ne.s32.totalorder %s206, %s207
      %p221 = scmp.eq.s32.totalorder %s29, 7
      %p222 = por %p220, %p221
      %p224 = scmp.ne.s32.totalorder %s207, %s223
      %p225 = scmp.eq.s32.totalorder %s29, 0
      %p226 = por %p224, %p225
      %s227 = ssub.s32 %s30, %s42
      %s228 = ssub.s32 %s31, %s38
      %s229 = sor.u32 %s227, %s228
      %p230 = scmp.eq.s32.totalorder %s229, 0
      %s232 = sadd.s32 %s231, 1
      %s233 = scalar_select %p230, %s231, %s232
      %p236 = pneg %p230
      %p237 = scmp.eq.s32.totalorder %s23, 7
      %p238 = por %p236, %p237
      %p239 = scmp.ne.s32.totalorder %s231, %s234
      %p240 = scmp.eq.s32.totalorder %s23, 0
      %p241 = por %p239, %p240
      %p242 = scmp.ne.s32.totalorder %s231, %s234
      %p243 = scmp.eq.s32.totalorder %s28, 7
      %p244 = por %p242, %p243
      %p245 = scmp.ne.s32.totalorder %s234, %s235
      %p246 = scmp.eq.s32.totalorder %s28, 0
      %p247 = por %p245, %p246
      %p248 = scmp.ne.s32.totalorder %s234, %s235
      %p249 = scmp.eq.s32.totalorder %s29, 7
      %p250 = por %p248, %p249
      %p252 = scmp.ne.s32.totalorder %s235, %s251
      %p253 = scmp.eq.s32.totalorder %s29, 0
      %p254 = por %p252, %p253
      %s255 = ssub.s32 %s30, %s42
      %p256 = scmp.eq.s32.totalorder %s255, 0
      %s258 = sadd.s32 %s257, 1
      %s259 = scalar_select %p256, %s257, %s258
      %p262 = pneg %p256
      %p263 = scmp.eq.s32.totalorder %s23, 7
      %p264 = por %p262, %p263
      %p265 = scmp.ne.s32.totalorder %s257, %s260
      %p266 = scmp.eq.s32.totalorder %s23, 0
      %p267 = por %p265, %p266
      %p268 = scmp.ne.s32.totalorder %s257, %s260
      %p269 = scmp.eq.s32.totalorder %s28, 7
      %p270 = por %p268, %p269
      %p271 = scmp.ne.s32.totalorder %s260, %s261
      %p272 = scmp.eq.s32.totalorder %s28, 0
      %p273 = por %p271, %p272
      %p274 = scmp.ne.s32.totalorder %s260, %s261
      %p275 = scmp.eq.s32.totalorder %s29, 7
      %p276 = por %p274, %p275
      %p278 = scmp.ne.s32.totalorder %s261, %s277
      %p279 = scmp.eq.s32.totalorder %s29, 0
      %p280 = por %p278, %p279
      %p281 = scmp.le.s32.totalorder 1, %s23
      %p282 = scmp.lt.s32.totalorder %s23, 9
      %p283 = pnand %p281, %p282
      %p284 = pneg %p283
      // Predicated region
      $region9: #{tpu_custom_call.1} parent=5 // pred_check
        _
      $region10: #{tpu_custom_call.1} parent=5 // pred_check_branch
        %286 = sbr.rel (%p283) target = $region12
      $region11: #{tpu_custom_call.1} parent=5 // pred_region
        %s287 = ssub.s32 %s23, 1
      $region12: #{tpu_custom_call.1} parent=5 // pred_fallthru
        _
      %p288 = scmp.lt.s32.totalorder %s23, 8
      // Predicated region
      $region13: #{tpu_custom_call.1} parent=5 // pred_check
        %p289 = pneg %p288
      $region14: #{tpu_custom_call.1} parent=5 // pred_check_branch
        %291 = sbr.rel (%p289) target = $region16
      $region15: #{tpu_custom_call.1} parent=5 // pred_region
        // Predicated region
        $region17: #{tpu_custom_call.1} parent=15 // pred_check
          %p292 = pneg %p55
        $region18: #{tpu_custom_call.1} parent=15 // pred_check_branch
          %294 = sbr.rel (%p292) target = $region20
        $region19: #{tpu_custom_call.1} parent=15 // pred_region
          %p295 = scmp.lt.s32.totalorder %s30, 1
          %s296 = scalar_select %p295, %s30, 1
          %s297 = smul.addr %s296, 8
          %s298 = scalar_lea.vmem %s0, %s297
        $region20: #{tpu_custom_call.1} parent=15 // pred_fallthru
          _
        // Predicated region
        $region21: #{tpu_custom_call.1} parent=15 // pred_check
          %p299 = pneg %p81
        $region22: #{tpu_custom_call.1} parent=15 // pred_check_branch
          %301 = sbr.rel (%p299) target = $region24
        $region23: #{tpu_custom_call.1} parent=15 // pred_region
          %p302 = scmp.lt.s32.totalorder %s30, 1
          %s303 = scalar_select %p302, %s30, 1
          %s304 = smul.addr %s303, 8
          %s305 = scalar_lea.vmem %s1, %s304
        $region24: #{tpu_custom_call.1} parent=15 // pred_fallthru
          _
        // Predicated region
        $region25: #{tpu_custom_call.1} parent=15 // pred_check
          %p306 = pneg %p107
        $region26: #{tpu_custom_call.1} parent=15 // pred_check_branch
          %308 = sbr.rel (%p306) target = $region28
        $region27: #{tpu_custom_call.1} parent=15 // pred_region
          %p309 = scmp.lt.s32.totalorder %s30, 1
          %s310 = scalar_select %p309, %s30, 1
          %s311 = smul.addr %s310, 8
          %s312 = scalar_lea.vmem %s2, %s311
        $region28: #{tpu_custom_call.1} parent=15 // pred_fallthru
          _
        // Predicated region
        $region29: #{tpu_custom_call.1} parent=15 // pred_check
          %p313 = pneg %p133
        $region30: #{tpu_custom_call.1} parent=15 // pred_check_branch
          %315 = sbr.rel (%p313) target = $region32
        $region31: #{tpu_custom_call.1} parent=15 // pred_region
          %p316 = scmp.lt.s32.totalorder %s30, 1
          %s317 = scalar_select %p316, %s30, 1
          %s318 = scalar_lea.vmem %s3, %s317
        $region32: #{tpu_custom_call.1} parent=15 // pred_fallthru
          _
        // Predicated region
        $region33: #{tpu_custom_call.1} parent=15 // pred_check
          %p319 = pneg %p159
        $region34: #{tpu_custom_call.1} parent=15 // pred_check_branch
          %321 = sbr.rel (%p319) target = $region36
        $region35: #{tpu_custom_call.1} parent=15 // pred_region
          %p322 = scmp.lt.s32.totalorder %s30, 1
          %s323 = scalar_select %p322, %s30, 1
          %s324 = smul.addr %s323, 8
          %s325 = scalar_lea.vmem %s4, %s324
        $region36: #{tpu_custom_call.1} parent=15 // pred_fallthru
          _
        // Predicated region
        $region37: #{tpu_custom_call.1} parent=15 // pred_check
          %p326 = pneg %p185
        $region38: #{tpu_custom_call.1} parent=15 // pred_check_branch
          %328 = sbr.rel (%p326) target = $region40
        $region39: #{tpu_custom_call.1} parent=15 // pred_region
          %p329 = scmp.lt.s32.totalorder %s30, 1
          %s330 = scalar_select %p329, %s30, 1
          %s331 = smul.addr %s330, 8
          %s332 = scalar_lea.vmem %s5, %s331
        $region40: #{tpu_custom_call.1} parent=15 // pred_fallthru
          _
        // Predicated region
        $region41: #{tpu_custom_call.1} parent=15 // pred_check
          %p333 = pneg %p213
        $region42: #{tpu_custom_call.1} parent=15 // pred_check_branch
          %335 = sbr.rel (%p333) target = $region44
        $region43: #{tpu_custom_call.1} parent=15 // pred_region
          %s336 = sand.u32 %s203, 1
          %s337 = scalar_lea.sflag [#allocation7], %s336
          %s338 = sand.u32 %s203, 1
          %s339 = smul.addr %s338, 16
          %s340 = scalar_lea.vmem [#allocation6], %s339
          %s341 = smul.u32 2, %s31
          %343 = vsyncadd %s337, 0
          %s344 = smul.addr %s30, 8
          %s345 = sadd.s32 %s341, %s344
          %s346 = smul.addr %s345, 8
          %s347 = scalar_lea.hbm %s6, %s346
          %s349 = sshll.u32 %s347, 4
          %s350 = int_to_ptr.hbm [resolvable:$true] %s349
          %s351 = sshll.u32 %s340, 4
          %s352 = int_to_ptr.vmem [resolvable:$true] %s351
          %354 = dma.hbm_to_vmem [thread:$0]  %s350, 256, %s352, %s337
        $region44: #{tpu_custom_call.1} parent=15 // pred_fallthru
          _
        // Predicated region
        $region45: #{tpu_custom_call.1} parent=15 // pred_check
          %p355 = pneg %p241
        $region46: #{tpu_custom_call.1} parent=15 // pred_check_branch
          %357 = sbr.rel (%p355) target = $region48
        $region47: #{tpu_custom_call.1} parent=15 // pred_region
          %s358 = sand.u32 %s231, 1
          %s359 = scalar_lea.sflag [#allocation10], %s358
          %s360 = sand.u32 %s231, 1
          %s361 = smul.addr %s360, 16
          %s362 = scalar_lea.vmem [#allocation9], %s361
          %s363 = smul.u32 2, %s31
          %365 = vsyncadd %s359, 0
          %s366 = smul.addr %s30, 8
          %s367 = sadd.s32 %s363, %s366
          %s368 = smul.addr %s367, 8
          %s369 = scalar_lea.hbm %s7, %s368
          %s371 = sshll.u32 %s369, 4
          %s372 = int_to_ptr.hbm [resolvable:$true] %s371
          %s373 = sshll.u32 %s362, 4
          %s374 = int_to_ptr.vmem [resolvable:$true] %s373
          %376 = dma.hbm_to_vmem [thread:$0]  %s372, 256, %s374, %s359
        $region48: #{tpu_custom_call.1} parent=15 // pred_fallthru
          _
      $region16: #{tpu_custom_call.1} parent=5 // pred_fallthru
        _
      %p377 = scmp.le.s32.totalorder 1, %s23
      %p378 = scmp.lt.s32.totalorder %s23, 9
      %p379 = pnand %p377, %p378
      %p380 = pneg %p379
      // Predicated region
      $region49: #{tpu_custom_call.1} parent=5 // pred_check
        _
      $region50: #{tpu_custom_call.1} parent=5 // pred_check_branch
        %382 = sbr.rel (%p379) target = $region52
      $region51: #{tpu_custom_call.1} parent=5 // pred_region
        %s383 = ssub.s32 %s23, 1
        %s384 = sand.u32 %s206, 1
        %s385 = scalar_lea.sflag [#allocation7], %s384
        %s386 = sand.u32 %s206, 1
        %s387 = smul.addr %s386, 16
        %s388 = scalar_lea.vmem [#allocation6], %s387
        // Predicated region
        $region53: #{tpu_custom_call.1} parent=51 // pred_check
          %p389 = pneg %p219
        $region54: #{tpu_custom_call.1} parent=51 // pred_check_branch
          %391 = sbr.rel (%p389) target = $region56
        $region55: #{tpu_custom_call.1} parent=51 // pred_region
          %393 = dma.done %s385, 256
        $region56: #{tpu_custom_call.1} parent=51 // pred_fallthru
          _
        %s394 = sand.u32 %s234, 1
        %s395 = scalar_lea.sflag [#allocation10], %s394
        %s396 = sand.u32 %s234, 1
        %s397 = smul.addr %s396, 16
        %s398 = scalar_lea.vmem [#allocation9], %s397
        // Predicated region
        $region57: #{tpu_custom_call.1} parent=51 // pred_check
          %p399 = pneg %p247
        $region58: #{tpu_custom_call.1} parent=51 // pred_check_branch
          %401 = sbr.rel (%p399) target = $region60
        $region59: #{tpu_custom_call.1} parent=51 // pred_region
          %403 = dma.done %s395, 256
        $region60: #{tpu_custom_call.1} parent=51 // pred_fallthru
          _
        %p404 = scmp.lt.s32.totalorder %s32, 1
        %s405 = scalar_select %p404, %s32, 1
        %s406 = smul.addr %s405, 8
        %s407 = scalar_lea.vmem %s0, %s406
        %p408 = pneg %p61
        %p409 = pneg %p58
        %p410 = scmp.lt.s32.totalorder %s32, 1
        %s411 = scalar_select %p410, %s32, 1
        %s412 = smul.addr %s411, 8
        %s413 = scalar_lea.vmem %s1, %s412
        %p414 = pneg %p87
        %p415 = pneg %p84
        %p416 = scmp.lt.s32.totalorder %s32, 1
        %s417 = scalar_select %p416, %s32, 1
        %s418 = smul.addr %s417, 8
        %s419 = scalar_lea.vmem %s2, %s418
        %p420 = pneg %p113
        %p421 = pneg %p110
        %p422 = scmp.lt.s32.totalorder %s32, 1
        %s423 = scalar_select %p422, %s32, 1
        %s424 = scalar_lea.vmem %s3, %s423
        %p425 = pneg %p139
        %p426 = pneg %p136
        %p427 = scmp.lt.s32.totalorder %s32, 1
        %s428 = scalar_select %p427, %s32, 1
        %s429 = smul.addr %s428, 8
        %s430 = scalar_lea.vmem %s4, %s429
        %p431 = pneg %p165
        %p432 = pneg %p162
        %p433 = scmp.lt.s32.totalorder %s32, 1
        %s434 = scalar_select %p433, %s32, 1
        %s435 = smul.addr %s434, 8
        %s436 = scalar_lea.vmem %s5, %s435
        %p437 = pneg %p191
        %p438 = pneg %p188
        %s439 = sand.u32 %s206, 1
        %s440 = scalar_lea.sflag [#allocation7], %s439
        %s441 = sand.u32 %s206, 1
        %s442 = smul.addr %s441, 16
        %s443 = scalar_lea.vmem [#allocation6], %s442
        %p444 = pneg %p219
        %p445 = pneg %p216
        %s446 = sand.u32 %s234, 1
        %s447 = scalar_lea.sflag [#allocation10], %s446
        %s448 = sand.u32 %s234, 1
        %s449 = smul.addr %s448, 16
        %s450 = scalar_lea.vmem [#allocation9], %s449
        %p451 = pneg %p247
        %p452 = pneg %p244
        %p453 = pneg %p273
        %p454 = pneg %p270
        %s455 = sand.u32 %s260, 1
        %s456 = scalar_lea.sflag [#allocation8], %s455
        %s457 = sand.u32 %s260, 1
        %s458 = smul.addr %s457, 8
        %s459 = scalar_lea.vmem [#allocation11], %s458
        %p460 = scmp.lt.s32.totalorder %s32, 1
        %s461 = scalar_select %p460, %s32, 1
        %s462 = smul.addr %s461, 8
        %s463 = scalar_lea.vmem %s0, %s462
        %p464 = scmp.lt.s32.totalorder %s32, 1
        %s465 = scalar_select %p464, %s32, 1
        %s466 = smul.addr %s465, 8
        %s467 = scalar_lea.vmem %s1, %s466
        %p468 = scmp.lt.s32.totalorder %s32, 1
        %s469 = scalar_select %p468, %s32, 1
        %s470 = smul.addr %s469, 8
        %s471 = scalar_lea.vmem %s2, %s470
        %p472 = scmp.lt.s32.totalorder %s32, 1
        %s473 = scalar_select %p472, %s32, 1
        %s474 = scalar_lea.vmem %s3, %s473
        %p475 = scmp.lt.s32.totalorder %s32, 1
        %s476 = scalar_select %p475, %s32, 1
        %s477 = smul.addr %s476, 8
        %s478 = scalar_lea.vmem %s4, %s477
        %p479 = scmp.lt.s32.totalorder %s32, 1
        %s480 = scalar_select %p479, %s32, 1
        %s481 = smul.addr %s480, 8
        %s482 = scalar_lea.vmem %s5, %s481
        %s483 = smul.u32 2, %s33
        %s484 = smul.u32 2, %s33
        %p485 = scmp.eq.s32.totalorder %s33, 0
        // Predicated region
        $region61: #{tpu_custom_call.1} parent=51 // pred_check
          %p486 = pneg %p485
        $region62: #{tpu_custom_call.1} parent=51 // pred_check_branch
          %488 = sbr.rel (%p486) target = $region64
        $region63: #{tpu_custom_call.1} parent=51 // pred_region
          %vm489 = vcmask 64512
          %490 = vst.msk [vmem:[#allocation2] sm:$0xff] %vm489, 0.0
          %vm491 = vcmask 7168
          %492 = vst.msk [vmem:[#allocation3] sm:$0xff] %vm491, 0.0
          %493 = vst.msk [vmem:[#allocation4] sm:$0xff] %vm491, 0.0
          %494 = vst.msk [vmem:[#allocation5] sm:$0xff] %vm491, 0.0
        $region64: #{tpu_custom_call.1} parent=51 // pred_fallthru
          _
        %v495 = vld [vmem:[%s388] sm:$0xff]
        %v496 = vld [vmem:[%s388 + $0x8] sm:$0xff]
        %v497 = vld [vmem:[%s398] sm:$0xff]
        %v498 = vld [vmem:[%s398 + $0x8] sm:$0xff]
        %v499 = vld [vmem:[#allocation2] sm:$0xff]
        %500 = vmatpush.xpose.msra.mxu0 0.0
        %501 = vmatpush.xpose.msra.mxu0 0.0
        %502 = vmatpush.xpose.msra.mxu0 0.0
        %503 = vmatpush.xpose.msra.mxu0 0.0
        %504 = vmatpush.xpose.msra.mxu0 0.0
        %505 = vmatpush.xpose.msra.mxu0 0.0
        %506 = vmatpush.xpose.msra.mxu0 0.0
        %507 = vmatpush.xpose.msra.mxu0 0.0
        %508 = vmatpush.xpose.msra.mxu0 0.0
        %509 = vmatpush.xpose.msra.mxu0 0.0
        %510 = vmatpush.xpose.msra.mxu0 0.0
        %511 = vmatpush.xpose.msra.mxu0 0.0
        %512 = vmatpush.xpose.msra.mxu0 0.0
        %513 = vmatpush.xpose.msra.mxu0 0.0
        %514 = vmatpush.xpose.msra.mxu0 0.0
        %515 = vmatpush.xpose.msra.mxu0 %v497
        %516 = vmatmul.f32.gmra.mxu0 %v495
        %v517 = vpop.f32.mrf.mxu0
        %v518 = vadd.f32 0.0, %v517
        %519 = vdwg.mxu0
        %520 = vmatpush.xpose.msra.mxu0 0.0
        %521 = vmatpush.xpose.msra.mxu0 0.0
        %522 = vmatpush.xpose.msra.mxu0 0.0
        %523 = vmatpush.xpose.msra.mxu0 0.0
        %524 = vmatpush.xpose.msra.mxu0 0.0
        %525 = vmatpush.xpose.msra.mxu0 0.0
        %526 = vmatpush.xpose.msra.mxu0 0.0
        %527 = vmatpush.xpose.msra.mxu0 0.0
        %528 = vmatpush.xpose.msra.mxu0 0.0
        %529 = vmatpush.xpose.msra.mxu0 0.0
        %530 = vmatpush.xpose.msra.mxu0 0.0
        %531 = vmatpush.xpose.msra.mxu0 0.0
        %532 = vmatpush.xpose.msra.mxu0 0.0
        %533 = vmatpush.xpose.msra.mxu0 0.0
        %534 = vmatpush.xpose.msra.mxu0 0.0
        %535 = vmatpush.xpose.msra.mxu0 %v498
        %536 = vmatmul.f32.gmra.mxu0 %v496
        %v537 = vpop.f32.mrf.mxu0
        %v538 = vadd.f32 %v518, %v537
        %539 = vdwg.mxu0
        %v540 = vadd.f32 %v499, %v538
        %vm541 = vcmask 64512
        %542 = vst.msk [vmem:[#allocation2] sm:$0xff] %vm541, %v540
        %v543 = vld [vmem:[#allocation3] sm:$0xff]
        %v544 = vadd.f32 %v495, %v496
        %545 = vadd.xlane.f32.xlu0 %v544
        %v546 = vpop.xlane.xlu0 %545
        %v547 = vadd.f32 %v543, %v546
        %vm548 = vcmask 7168
        %549 = vst.msk [vmem:[#allocation3] sm:$0xff] %vm548, %v547
        %v550 = vld [vmem:[#allocation4] sm:$0xff]
        %v551 = vadd.f32 %v497, %v498
        %552 = vadd.xlane.f32.xlu0 %v551
        %v553 = vpop.xlane.xlu0 %552
        %v554 = vadd.f32 %v550, %v553
        %555 = vst.msk [vmem:[#allocation4] sm:$0xff] %vm548, %v554
        %v556 = vld [vmem:[#allocation5] sm:$0xff]
        %v557 = vmax.f32 %v495, 0.0
        %v558 = vmax.f32 %v496, 0.0
        %v559 = vand.u32 2147483647, %v495
        %v560 = vand.u32 2147483647, %v496
        %v561 = vsub.f32 0.0, %v559
        %v562 = vsub.f32 0.0, %v560
        %v563 = vmul.f32 %v561, 1.442695
        %v564 = vpow.pop %v563
        %v565 = vmul.f32 %v562, 1.442695
        %v566 = vpow.pop %v565
        %v567 = vadd.f32 %v564, 1.0
        %v568 = vadd.f32 %v566, 1.0
        %v569 = vlog2.pop %v567
        %v570 = vmul.f32 %v569, 0.6931472
        %v571 = vlog2.pop %v568
        %v572 = vmul.f32 %v571, 0.6931472
        %v573 = vadd.f32 %v557, %v570
        %v574 = vadd.f32 %v558, %v572
        %v575 = vadd.f32 %v573, %v574
        %576 = vadd.xlane.f32.xlu0 %v575
        %v577 = vpop.xlane.xlu0 %576
        %v578 = vadd.f32 %v556, %v577
        %579 = vst.msk [vmem:[#allocation5] sm:$0xff] %vm548, %v578
        %p580 = scmp.eq.s32.totalorder %s33, 3
        // Predicated region
        $region65: #{tpu_custom_call.1} parent=51 // pred_check
          %p581 = pneg %p580
        $region66: #{tpu_custom_call.1} parent=51 // pred_check_branch
          %583 = sbr.rel (%p581) target = $region68
        $region67: #{tpu_custom_call.1} parent=51 // pred_region
          %v584 = vld [vmem:[%s463] sm:$0xff]
          %v585 = vld [vmem:[%s467] sm:$0xff]
          %v586 = vld [vmem:[%s471] sm:$0xff]
          %v587 = vld [vmem:[%s474] sm:$0x1]
          %v588 = vld [vmem:[%s478] sm:$0xff]
          %v589 = vld [vmem:[%s482] sm:$0xff]
          %v590 = vcvt.s32.f32 %v587
          %vm591 = vcmp.gt.s32.totalorder %v587, 0
          %v592 = vsel %vm591, 1, 0
          %v593 = vcvt.s32.f32 %v592
          %v594 = vsel %vm548, %v588, 0.0
          %v595 = vrot.slane %v594, 4
          %v596 = vadd.f32 %v594, %v595
          %v597 = vrot.slane %v596, 2
          %v598 = vadd.f32 %v596, %v597
          %v599 = vrot.slane %v598, 1
          %v600 = vadd.f32 %v598, %v599
          %vm601 = vcmp.gt.f32.partialorder %v600, 0.0
          %v602 = vxor.u32 %v584, 2147483648
          %v603 = vmul.f32 %v602, 1.442695
          %v604 = vpow.pop %v603
          %v605 = vadd.f32 %v604, 1.0
          %v606 = vrcp.pop %v605
          %v607 = vmul.f32 %v605, %v606
          %v608 = vsub.f32 1.0, %v607
          %v609 = vmul.f32 %v606, %v608
          %v610 = vadd.f32 %v606, %v609
          %vm611 = vweird.f32 %v605
          %vm612 = vweird.f32 %v606
          %vm613 = vmor %vm611, %vm612
          %v614 = vsel %vm613, %v606, %v610
          %v615 = vand.u32 2147483647, %v605
          %vm616 = vcmp.eq.f32.partialorder %v615, 8.507059e+37
          %v617 = vand.u32 %v605, 2147483648
          %v618 = vor.u32 1.1754944e-38, %v617
          %v619 = vsel %vm616, %v618, %v614
          %v620 = vmul.f32 1.0, %v619
          %v621 = vmax.f32 %v620, 1e-06
          %v622 = vmin.f32 %v621, 0.999999
          %vm623 = vcmp.eq.f32.partialorder %v590, 1.0
          %v624 = vsub.f32 1.0, %v622
          %v625 = vsel %vm623, 1, 0
          %v626 = vperm.slane %v625, 0
          %vm627 = vcmp.eq.s32.totalorder %v626, 1
          %v628 = vsel %vm627, %v622, %v624
          %v629 = vsub.f32 1.0, %v628
          %v630 = vmul.f32 %v629, %v629
          %v631 = vsel %vm623, 0.25, 0.75
          %v633 = vperm.slane %v631, 0
          %v635 = vmul.f32 %v630, %v633
          %v636 = vlog2.pop %v628
          %v637 = vmul.f32 %v636, 0.6931472
          %v638 = vsub.f32 0.0, %v637
          %v639 = vmul.f32 %v635, %v638
          %v640 = vsel %vm541, %v639, 0.0
          %641 = vadd.xlane.f32.xlu0 %v640
          %v642 = vpop.xlane.xlu0 %641
          %v643 = vrot.slane %v642, 4
          %v644 = vadd.f32 %v642, %v643
          %v645 = vrot.slane %v644, 2
          %v646 = vadd.f32 %v644, %v645
          %v647 = vrot.slane %v646, 1
          %v648 = vadd.f32 %v646, %v647
          %v649 = vmul.f32 %v648, 0.015625
          %v650 = vsub.f32 %v585, %v589
          %v651 = vand.u32 2147483647, %v650
          %vm652 = vcmp.lt.f32.partialorder %v651, 1.0
          %v653 = vmul.f32 %v650, 0.5
          %v654 = vmul.f32 %v653, %v650
          %v655 = vsub.f32 %v651, 0.5
          %v656 = vsel %vm652, %v654, %v655
          %658 = vset.pattern.permute.xlu0 0
          %659 = vperm.xlu0 %658, %v588
          %v660 = vpop.permute.xlu0 %659
          %v662 = vmul.f32 %v656, %v660
          %vm663 = vcmask 31744
          %v664 = vsel %vm663, %v662, 0.0
          %665 = vadd.xlane.f32.xlu0 %v664
          %v666 = vpop.xlane.xlu0 %665
          %v667 = vrot.slane %v666, 4
          %v668 = vadd.f32 %v666, %v667
          %v669 = vrot.slane %v668, 2
          %v670 = vadd.f32 %v668, %v669
          %v671 = vrot.slane %v670, 1
          %v672 = vadd.f32 %v670, %v671
          %v673 = vmax.f32 %v600, 1.0
          %v674 = vmul.f32 %v673, 4.0
          %v675 = vrcp.pop %v674
          %v676 = vmul.f32 %v674, %v675
          %v677 = vsub.f32 1.0, %v676
          %v678 = vmul.f32 %v675, %v677
          %v679 = vadd.f32 %v675, %v678
          %vm680 = vweird.f32 %v674
          %vm681 = vweird.f32 %v675
          %vm682 = vmor %vm680, %vm681
          %v683 = vsel %vm682, %v675, %v679
          %v684 = vand.u32 2147483647, %v674
          %vm685 = vcmp.eq.f32.partialorder %v684, 8.507059e+37
          %v686 = vand.u32 %v674, 2147483648
          %v687 = vor.u32 1.1754944e-38, %v686
          %v688 = vsel %vm685, %v687, %v683
          %v689 = vmul.f32 %v672, %v688
          %v691 = vperm.slane %v593, 0
          %v693 = vmul.f32 %v586, %v691
          %v694 = vld [vmem:[#allocation2] sm:$0xff]
          %v695 = vmul.f32 %v693, %v694
          %v696 = vsel %vm541, %v695, 0.0
          %697 = vadd.xlane.f32.xlu0 %v696
          %v698 = vpop.xlane.xlu0 %697
          %v699 = vrot.slane %v698, 4
          %v700 = vadd.f32 %v698, %v699
          %v701 = vrot.slane %v700, 2
          %v702 = vadd.f32 %v700, %v701
          %v703 = vrot.slane %v702, 1
          %v704 = vadd.f32 %v702, %v703
          %v705 = vsel %vm541, %v693, 0.0
          %706 = vadd.xlane.f32.xlu0 %v705
          %v707 = vpop.xlane.xlu0 %706
          %v708 = vld [vmem:[#allocation3] sm:$0xff]
          %v709 = vmul.f32 %v708, %v707
          %v710 = vadd.f32 %v709, 0.0
          %v711 = vsel %vm548, %v710, 0.0
          %v712 = vrot.slane %v711, 4
          %v713 = vadd.f32 %v711, %v712
          %v714 = vrot.slane %v713, 2
          %v715 = vadd.f32 %v713, %v714
          %v716 = vrot.slane %v715, 1
          %v717 = vadd.f32 %v715, %v716
          %v718 = vld [vmem:[#allocation4] sm:$0xff]
          %v719 = vmul.f32 %v718, %v588
          %v720 = vadd.f32 %v719, 0.0
          %v721 = vsel %vm548, %v720, 0.0
          %v722 = vrot.slane %v721, 4
          %v723 = vadd.f32 %v721, %v722
          %v724 = vrot.slane %v723, 2
          %v725 = vadd.f32 %v723, %v724
          %v726 = vrot.slane %v725, 1
          %v727 = vadd.f32 %v725, %v726
          %v728 = vmul.f32 %v704, 2.0
          %v729 = vadd.f32 %v728, 1e-06
          %v730 = vadd.f32 %v717, %v727
          %v731 = vadd.f32 %v730, 1e-06
          %v732 = vrcp.pop %v731
          %v733 = vmul.f32 %v731, %v732
          %v734 = vsub.f32 1.0, %v733
          %v735 = vmul.f32 %v732, %v734
          %v736 = vadd.f32 %v732, %v735
          %vm737 = vweird.f32 %v731
          %vm738 = vweird.f32 %v732
          %vm739 = vmor %vm737, %vm738
          %v740 = vsel %vm739, %v732, %v736
          %v741 = vand.u32 2147483647, %v731
          %vm742 = vcmp.eq.f32.partialorder %v741, 8.507059e+37
          %v743 = vand.u32 %v731, 2147483648
          %v744 = vor.u32 1.1754944e-38, %v743
          %v745 = vsel %vm742, %v744, %v740
          %v746 = vmul.f32 %v729, %v745
          %v747 = vsub.f32 1.0, %v746
          %v748 = vlaneseq
          %v749 = vshrl.u32 %v748, 7
          %v750 = vlaneseq
          %v751 = vand.u32 %v750, 127
          %vm752 = vcmp.eq.s32.totalorder %v749, %v751
          %v753 = vsel %vm752, %v694, 0.0
          %v754 = vsel %vm541, %v753, 0.0
          %755 = vadd.xlane.f32.xlu0 %v754
          %v756 = vpop.xlane.xlu0 %755
          %v757 = vrot.slane %v756, 4
          %v758 = vadd.f32 %v756, %v757
          %v759 = vrot.slane %v758, 2
          %v760 = vadd.f32 %v758, %v759
          %v761 = vrot.slane %v760, 1
          %v762 = vadd.f32 %v760, %v761
          %v763 = vld [vmem:[#allocation5] sm:$0xff]
          %v764 = vsel %vm548, %v763, 0.0
          %v765 = vrot.slane %v764, 4
          %v766 = vadd.f32 %v764, %v765
          %v767 = vrot.slane %v766, 2
          %v768 = vadd.f32 %v766, %v767
          %v769 = vrot.slane %v768, 1
          %v770 = vadd.f32 %v768, %v769
          %v771 = vsub.f32 %v770, %v762
          %v772 = vmul.f32 %v771, 0.00012207031
          %v773 = vsel %vm541, %v584, -inf
          %v774 = vrot.slane %v773, 4
          %v775 = vmax.f32 %v773, %v774
          %v776 = vrot.slane %v775, 2
          %v777 = vmax.f32 %v775, %v776
          %v778 = vrot.slane %v777, 1
          %v779 = vmax.f32 %v777, %v778
          %v780 = vsub.f32 %v584, %v779
          %v781 = vmul.f32 %v780, 1.442695
          %v782 = vpow.pop %v781
          %v783 = vsel %vm541, %v782, 0.0
          %v784 = vrot.slane %v783, 4
          %v785 = vadd.f32 %v783, %v784
          %v786 = vrot.slane %v785, 2
          %v787 = vadd.f32 %v785, %v786
          %v788 = vrot.slane %v787, 1
          %v789 = vadd.f32 %v787, %v788
          %v790 = vlog2.pop %v789
          %v791 = vmul.f32 %v790, 0.6931472
          %v792 = vsub.f32 %v780, %v791
          %v793 = vperm.slane %v587, 0
          %vm794 = vcmp.eq.s32.totalorder %v749, %v793
          %v795 = vsel %vm794, 1, 0
          %v796 = vcvt.s32.f32 %v795
          %v797 = vmul.f32 %v796, %v792
          %v798 = vsel %vm541, %v797, 0.0
          %v799 = vrot.slane %v798, 4
          %v800 = vadd.f32 %v798, %v799
          %v801 = vrot.slane %v800, 2
          %v802 = vadd.f32 %v800, %v801
          %v803 = vrot.slane %v802, 1
          %v804 = vadd.f32 %v802, %v803
          %v805 = vsub.f32 0.0, %v804
          %vm806 = vcmp.ne.s32.totalorder %v587, 255
          %v807 = vsel %vm806, 1, 0
          %v808 = vcvt.s32.f32 %v807
          %vm809 = vcmask 57344
          %v810 = vsel %vm809, %v808, 0.0
          %811 = vadd.xlane.f32.xlu0 %v810
          %v812 = vpop.xlane.xlu0 %811
          %v813 = vmul.f32 %v805, %v808
          %v814 = vsel %vm809, %v813, 0.0
          %815 = vadd.xlane.f32.xlu0 %v814
          %v816 = vpop.xlane.xlu0 %815
          %v817 = vmax.f32 %v812, 1.0
          %v818 = vrcp.pop %v817
          %v819 = vmul.f32 %v817, %v818
          %v820 = vsub.f32 1.0, %v819
          %v821 = vmul.f32 %v818, %v820
          %v822 = vadd.f32 %v818, %v821
          %vm823 = vweird.f32 %v817
          %vm824 = vweird.f32 %v818
          %vm825 = vmor %vm823, %vm824
          %v826 = vsel %vm825, %v818, %v822
          %v827 = vand.u32 2147483647, %v817
          %vm828 = vcmp.eq.f32.partialorder %v827, 8.507059e+37
          %v829 = vand.u32 %v817, 2147483648
          %v830 = vor.u32 1.1754944e-38, %v829
          %v831 = vsel %vm828, %v830, %v826
          %v832 = vmul.f32 %v816, %v831
          %v833 = vsel %vm601, %v649, 0.0
          %v834 = vmul.f32 %v689, 1.5
          %v835 = vsel %vm601, %v834, 0.0
          %v836 = vmul.f32 %v747, 6.125
          %v837 = vsel %vm601, %v836, 0.0
          %v838 = vsel %vm601, %v772, 0.0
          %v839 = vsel %vm601, %v832, 0.0
          %vm840 = vcmp.eq.s32.totalorder %v749, 0
          %842 = vset.pattern.permute.xlu0 0
          %843 = vperm.xlu0 %842, %v833
          %v844 = vpop.permute.xlu0 %843
          %v846 = vsel %vm840, %v844, 0.0
          %vm847 = vcmp.eq.s32.totalorder %v749, 1
          %849 = vset.pattern.permute.xlu0 0
          %850 = vperm.xlu0 %849, %v835
          %v851 = vpop.permute.xlu0 %850
          %v853 = vsel %vm847, %v851, 0.0
          %v854 = vadd.f32 %v846, %v853
          %vm855 = vcmp.eq.s32.totalorder %v749, 2
          %857 = vset.pattern.permute.xlu0 0
          %858 = vperm.xlu0 %857, %v837
          %v859 = vpop.permute.xlu0 %858
          %v861 = vsel %vm855, %v859, 0.0
          %v862 = vadd.f32 %v854, %v861
          %vm863 = vcmp.eq.s32.totalorder %v749, 3
          %865 = vset.pattern.permute.xlu0 0
          %866 = vperm.xlu0 %865, %v838
          %v867 = vpop.permute.xlu0 %866
          %v869 = vsel %vm863, %v867, 0.0
          %v870 = vadd.f32 %v862, %v869
          %vm871 = vcmp.eq.s32.totalorder %v749, 4
          %s873 = vtos %v839
          %v874 = vstv %s873
          %v876 = vsel %vm871, %v874, 0.0
          %v877 = vadd.f32 %v870, %v876
          %878 = vst [vmem:[%s459] sm:$0xff] %v877
        $region68: #{tpu_custom_call.1} parent=51 // pred_fallthru
          _
        %s879 = sand.u32 %s260, 1
        %s880 = scalar_lea.sflag [#allocation8], %s879
        %s881 = sand.u32 %s260, 1
        %s882 = smul.addr %s881, 8
        %s883 = scalar_lea.vmem [#allocation11], %s882
        // Predicated region
        $region69: #{tpu_custom_call.1} parent=51 // pred_check
          %p884 = pneg %p270
        $region70: #{tpu_custom_call.1} parent=51 // pred_check_branch
          %886 = sbr.rel (%p884) target = $region72
        $region71: #{tpu_custom_call.1} parent=51 // pred_region
          %888 = vsyncadd %s880, 0
          %s889 = smul.addr %s32, 8
          %s890 = scalar_lea.hbm %s8, %s889
          %s892 = sshll.u32 %s883, 4
          %s893 = int_to_ptr.vmem [resolvable:$true] %s892
          %s894 = sshll.u32 %s890, 4
          %s895 = int_to_ptr.hbm [resolvable:$true] %s894
          %897 = dma.vmem_to_hbm [thread:$0]  %s893, 128, %s895, %s880
        $region72: #{tpu_custom_call.1} parent=51 // pred_fallthru
          _
      $region52: #{tpu_custom_call.1} parent=5 // pred_fallthru
        _
      %p898 = scmp.le.s32.totalorder 2, %s23
      // Predicated region
      $region73: #{tpu_custom_call.1} parent=5 // pred_check
        %p899 = pneg %p898
      $region74: #{tpu_custom_call.1} parent=5 // pred_check_branch
        %901 = sbr.rel (%p899) target = $region76
      $region75: #{tpu_custom_call.1} parent=5 // pred_region
        %s902 = ssub.s32 %s23, 2
        // Predicated region
        $region77: #{tpu_custom_call.1} parent=75 // pred_check
          %p903 = pneg %p276
        $region78: #{tpu_custom_call.1} parent=75 // pred_check_branch
          %905 = sbr.rel (%p903) target = $region80
        $region79: #{tpu_custom_call.1} parent=75 // pred_region
          %s906 = sand.u32 %s261, 1
          %s907 = scalar_lea.sflag [#allocation8], %s906
          %s908 = sand.u32 %s261, 1
          %s909 = smul.addr %s908, 8
          %s910 = scalar_lea.vmem [#allocation11], %s909
          %912 = dma.done %s907, 128
        $region80: #{tpu_custom_call.1} parent=75 // pred_fallthru
          _
      $region76: #{tpu_custom_call.1} parent=5 // pred_fallthru
        _
    $region6: #{tpu_custom_call.1} parent=1 // loop_footer
      %s27 = sadd.s32 1, %s23
    $region7: #{tpu_custom_call.1} parent=1 // loop_footer_branch
      %22 = sbr.rel target = $region3
    $region8: #{tpu_custom_call.1} parent=1 // loop_exit
      _
    %913 = vsyncpa [#allocation7], 1
    %s914 = scalar_lea.sflag [#allocation7], 1
    %915 = vsyncpa %s914, 1
    %916 = vsyncpa [#allocation10], 1
    %s917 = scalar_lea.sflag [#allocation10], 1
    %918 = vsyncpa %s917, 1
    %919 = vsyncpa [#allocation8], 1
    %s920 = scalar_lea.sflag [#allocation8], 1
    %921 = vsyncpa %s920, 1

</llo_original>
